<compile_context>
chip_gen: v5e
topology: v5e:2x2
jax: 0.10.0
libtpu: 0.0.40
codegen_flags: <defaults>
</compile_context>

<pallas_src>
import jax
import jax.numpy as jnp
from jax.experimental import pallas as pl
from jax.experimental.pallas import tpu as pltpu

_DIMS = [784, 520, 320, 240, 120, 10]          # logical (PyTorch) layer widths
_PAD_DIMS = [784, 520, 320, 256, 128, 128]     # lane/MXU-friendly padded widths
_OUT_PAD = _PAD_DIMS[-1]                       # lane-dense padded logits width


def _mlp_kernel(x_ref,
                w1_ref, w2_ref, w3_ref, w4_ref, w5_ref,
                b1_ref, b2_ref, b3_ref, b4_ref, b5_ref,
                o_ref):
    """Fused 5-layer MLP (ReLU after first 4 layers) on one batch tile.

    x_ref : (TB, 784) f32 -> cast to bf16 in-kernel
    wN_ref: (in, out) bf16, padded widths per _PAD_DIMS (zero rows/cols)
    bN_ref: (1, out) f32, padded with zeros
    o_ref : (TB, 128) f32 -- cols 10..127 are exactly zero (zero w5/b5 cols)
    """
    h = x_ref[...].astype(jnp.bfloat16)   # in-kernel cast; hides under MXU

    def layer(h_bf16, w_ref, b_ref, relu):
        acc = jnp.dot(h_bf16, w_ref[...], preferred_element_type=jnp.float32)
        acc = acc + b_ref[...]             # lane-aligned (1, out) f32 broadcast
        if relu:
            acc = jnp.maximum(acc, 0.0)
        return acc

    h = layer(h, w1_ref, b1_ref, True).astype(jnp.bfloat16)
    h = layer(h, w2_ref, b2_ref, True).astype(jnp.bfloat16)
    h = layer(h, w3_ref, b3_ref, True).astype(jnp.bfloat16)
    h = layer(h, w4_ref, b4_ref, True).astype(jnp.bfloat16)
    # Final layer: raw logits (module feeds CrossEntropyLoss downstream).
    o_ref[...] = layer(h, w5_ref, b5_ref, False).astype(o_ref.dtype)


def prepare_params(params):
    """One-time parameter prep (hoisted out of the forward path).

    params: list of (W, b), W shaped (in, out) f32, b shaped (out,) f32
    returns: (weights_bf16_padded, biases_f32_padded) with _PAD_DIMS widths.
    Zero padding keeps lanes 0..9 of the logits bit-identical to the unpadded
    cascade (padded activation cols are ReLU(0)=0 and meet zero weight rows).
    """
    weights, biases = [], []
    for i, (w, b) in enumerate(params):
        in_p, out_p = _PAD_DIMS[i], _PAD_DIMS[i + 1]
        wp = jnp.zeros((in_p, out_p), jnp.float32)
        wp = wp.at[: w.shape[0], : w.shape[1]].set(w)
        bp = jnp.zeros((out_p,), jnp.float32).at[: b.shape[0]].set(b)
        weights.append(wp.astype(jnp.bfloat16))
        biases.append(bp[None, :].astype(jnp.float32))  # (1, out) row
    return weights, biases


def _pick_batch_tile(B, batch_tile):
    TB = min(batch_tile, B)
    if B >= 16:
        # Keep >= 2 grid steps so "parallel" batch axis can shard across the
        # two TensorCores on v7x (no-op on v5e/v6e, negligible extra overhead).
        half = ((pl.cdiv(B, 2) + 7) // 8) * 8
        TB = min(TB, half)
    if TB != B and TB % 8 != 0:
        TB = max(8, (TB // 8) * 8)   # (8, .) sublane rule unless block == full dim
    return TB


def mlp_forward(x_nchw, prepared, batch_tile=1024):
    """Run the fused MLP kernel.

    x_nchw  : (B, 1, 28, 28) float32 (PyTorch NCHW MNIST layout)
    prepared: output of prepare_params(params)
    returns : (B, 10) float32 logits
    """
    weights, biases = prepared
    B = x_nchw.shape[0]
    x = x_nchw.reshape(B, 784)          # stays f32; bf16 cast happens in-kernel

    TB = _pick_batch_tile(B, batch_tile)
    grid = (pl.cdiv(B, TB),)

    # Grid-resident operands: constant (0, 0) block index -> DMA'd once.
    resident = lambda shape: pl.BlockSpec(shape, lambda i: (0, 0))
    weight_specs = [resident(w.shape) for w in weights]
    bias_specs = [resident(b.shape) for b in biases]

    flops = 2 * B * sum(_PAD_DIMS[i] * _PAD_DIMS[i + 1] for i in range(5))
    param_bytes = sum(int(w.size) * 2 for w in weights) \
        + sum(int(b.size) * 4 for b in biases)
    cost = pl.CostEstimate(
        flops=flops,
        transcendentals=0,
        bytes_accessed=B * (784 * 4 + _OUT_PAD * 4) + param_bytes,
    )

    out_padded = pl.pallas_call(
        _mlp_kernel,
        out_shape=jax.ShapeDtypeStruct((B, _OUT_PAD), jnp.float32),
        grid_spec=pltpu.PrefetchScalarGridSpec(
            num_scalar_prefetch=0,
            grid=grid,
            in_specs=[pl.BlockSpec((TB, 784), lambda i: (i, 0))]
                     + weight_specs
                     + bias_specs,
            out_specs=pl.BlockSpec((TB, _OUT_PAD), lambda i: (i, 0)),
        ),
        compiler_params=pltpu.CompilerParams(
            dimension_semantics=("parallel",),
            vmem_limit_bytes=48 << 20,   # headroom for TB up to ~2K, safe on v7x
        ),
        cost_estimate=cost,
    )(x, *weights, *biases)

    return out_padded[:, :10]


def init_params(key):
    """Deterministic init matching PyTorch nn.Linear default (U[-k, k], k=1/sqrt(fan_in))."""
    params = []
    for i in range(len(_DIMS) - 1):
        fan_in, fan_out = _DIMS[i], _DIMS[i + 1]
        key, kw, kb = jax.random.split(key, 3)
        bound = 1.0 / (fan_in ** 0.5)
        # Stored as (in, out) == transpose of PyTorch's (out, in) weight.
        w = jax.random.uniform(kw, (fan_in, fan_out), jnp.float32, -bound, bound)
        b = jax.random.uniform(kb, (fan_out,), jnp.float32, -bound, bound)
        params.append((w, b))
    return params


def mlp_reference(x_nchw, params):
    """Pure-JAX reference with identical bf16-in / f32-accumulate numerics."""
    h = x_nchw.reshape(x_nchw.shape[0], 784).astype(jnp.bfloat16)
    out = None
    for i, (w, b) in enumerate(params):
        acc = jnp.dot(h, w.astype(jnp.bfloat16),
                      preferred_element_type=jnp.float32) + b[None, :]
        if i < len(params) - 1:
            h = jnp.maximum(acc, 0.0).astype(jnp.bfloat16)
        else:
            out = acc
    return out


if __name__ == "__main__":
    key = jax.random.PRNGKey(0)
    key, kx = jax.random.split(key)

    # Small MNIST-like batch: (B, C, H, W) = (8, 1, 28, 28)
    x = jax.random.normal(kx, (8, 1, 28, 28), dtype=jnp.float32)
    params = init_params(key)
    prepared = prepare_params(params)          # one-time weight/bias prep

    fwd = jax.jit(lambda xb: mlp_forward(xb, prepared))
    logits = jax.block_until_ready(fwd(x))

    ref = mlp_reference(x, params)
    assert logits.shape == (8, 10), logits.shape
    assert jnp.allclose(logits, ref, atol=1e-2, rtol=1e-2), "mismatch vs reference"

    print("KERNEL_OK")
</pallas_src>

<mosaic_0001>
module attributes {stable_mosaic.version = 11 : i64} {
  func.func @_mlp_kernel(%arg0: i32, %arg1: memref<8x784xf32, #tpu.memory_space<vmem>>, %arg2: memref<784x520xbf16, #tpu.memory_space<vmem>>, %arg3: memref<520x320xbf16, #tpu.memory_space<vmem>>, %arg4: memref<320x256xbf16, #tpu.memory_space<vmem>>, %arg5: memref<256x128xbf16, #tpu.memory_space<vmem>>, %arg6: memref<128x128xbf16, #tpu.memory_space<vmem>>, %arg7: memref<1x520xf32, #tpu.memory_space<vmem>>, %arg8: memref<1x320xf32, #tpu.memory_space<vmem>>, %arg9: memref<1x256xf32, #tpu.memory_space<vmem>>, %arg10: memref<1x128xf32, #tpu.memory_space<vmem>>, %arg11: memref<1x128xf32, #tpu.memory_space<vmem>>, %arg12: memref<8x128xf32, #tpu.memory_space<vmem>>) attributes {dimension_semantics = [#tpu.dimension_semantics<parallel>], iteration_bounds = array<i64: 1>, scalar_prefetch = 0 : i64, scratch_operands = 0 : i64, tpu.core_type = #tpu.core_type<tc>, window_params = [{transform_indices = @transform_0, window_bounds = array<i64: 8, 784>}, {pipeline_mode = #tpu.pipeline_mode<synchronous>, transform_indices = @transform_1, window_bounds = array<i64: 784, 520>}, {pipeline_mode = #tpu.pipeline_mode<synchronous>, transform_indices = @transform_2, window_bounds = array<i64: 520, 320>}, {pipeline_mode = #tpu.pipeline_mode<synchronous>, transform_indices = @transform_3, window_bounds = array<i64: 320, 256>}, {pipeline_mode = #tpu.pipeline_mode<synchronous>, transform_indices = @transform_4, window_bounds = array<i64: 256, 128>}, {pipeline_mode = #tpu.pipeline_mode<synchronous>, transform_indices = @transform_5, window_bounds = array<i64: 128, 128>}, {pipeline_mode = #tpu.pipeline_mode<synchronous>, transform_indices = @transform_6, window_bounds = array<i64: 1, 520>}, {pipeline_mode = #tpu.pipeline_mode<synchronous>, transform_indices = @transform_7, window_bounds = array<i64: 1, 320>}, {pipeline_mode = #tpu.pipeline_mode<synchronous>, transform_indices = @transform_8, window_bounds = array<i64: 1, 256>}, {pipeline_mode = #tpu.pipeline_mode<synchronous>, transform_indices = @transform_9, window_bounds = array<i64: 1, 128>}, {pipeline_mode = #tpu.pipeline_mode<synchronous>, transform_indices = @transform_10, window_bounds = array<i64: 1, 128>}, {transform_indices = @transform_11, window_bounds = array<i64: 8, 128>}]} {
    %c0 = arith.constant 0 : index
    %c0_0 = arith.constant 0 : index
    %0 = vector.load %arg1[%c0, %c0_0] : memref<8x784xf32, #tpu.memory_space<vmem>>, vector<8x784xf32>
    %1 = arith.truncf %0 : vector<8x784xf32> to vector<8x784xbf16>
    %c0_1 = arith.constant 0 : index
    %c0_2 = arith.constant 0 : index
    %2 = vector.load %arg2[%c0_1, %c0_2] : memref<784x520xbf16, #tpu.memory_space<vmem>>, vector<784x520xbf16>
    %cst = arith.constant dense<0.000000e+00> : vector<8x520xf32>
    %3 = tpu.matmul %1, %2, %cst {dimension_numbers = #tpu.dot_dimension_numbers<[1], [0], [0], [1], [0, 0, 1, 1], [], []>} : vector<8x784xbf16>, vector<784x520xbf16>, vector<8x520xf32> -> vector<8x520xf32>
    %c0_3 = arith.constant 0 : index
    %c0_4 = arith.constant 0 : index
    %4 = vector.load %arg7[%c0_3, %c0_4] : memref<1x520xf32, #tpu.memory_space<vmem>>, vector<1x520xf32>
    %5 = vector.broadcast %4 : vector<1x520xf32> to vector<8x520xf32>
    %6 = arith.addf %3, %5 : vector<8x520xf32>
    %cst_5 = arith.constant 0.000000e+00 : f32
    %7 = vector.broadcast %cst_5 : f32 to vector<8x520xf32>
    %8 = arith.maximumf %6, %7 : vector<8x520xf32>
    %9 = arith.truncf %8 : vector<8x520xf32> to vector<8x520xbf16>
    %c0_6 = arith.constant 0 : index
    %c0_7 = arith.constant 0 : index
    %10 = vector.load %arg3[%c0_6, %c0_7] : memref<520x320xbf16, #tpu.memory_space<vmem>>, vector<520x320xbf16>
    %cst_8 = arith.constant dense<0.000000e+00> : vector<8x320xf32>
    %11 = tpu.matmul %9, %10, %cst_8 {dimension_numbers = #tpu.dot_dimension_numbers<[1], [0], [0], [1], [0, 0, 1, 1], [], []>} : vector<8x520xbf16>, vector<520x320xbf16>, vector<8x320xf32> -> vector<8x320xf32>
    %c0_9 = arith.constant 0 : index
    %c0_10 = arith.constant 0 : index
    %12 = vector.load %arg8[%c0_9, %c0_10] : memref<1x320xf32, #tpu.memory_space<vmem>>, vector<1x320xf32>
    %13 = vector.broadcast %12 : vector<1x320xf32> to vector<8x320xf32>
    %14 = arith.addf %11, %13 : vector<8x320xf32>
    %cst_11 = arith.constant 0.000000e+00 : f32
    %15 = vector.broadcast %cst_11 : f32 to vector<8x320xf32>
    %16 = arith.maximumf %14, %15 : vector<8x320xf32>
    %17 = arith.truncf %16 : vector<8x320xf32> to vector<8x320xbf16>
    %c0_12 = arith.constant 0 : index
    %c0_13 = arith.constant 0 : index
    %18 = vector.load %arg4[%c0_12, %c0_13] : memref<320x256xbf16, #tpu.memory_space<vmem>>, vector<320x256xbf16>
    %cst_14 = arith.constant dense<0.000000e+00> : vector<8x256xf32>
    %19 = tpu.matmul %17, %18, %cst_14 {dimension_numbers = #tpu.dot_dimension_numbers<[1], [0], [0], [1], [0, 0, 1, 1], [], []>} : vector<8x320xbf16>, vector<320x256xbf16>, vector<8x256xf32> -> vector<8x256xf32>
    %c0_15 = arith.constant 0 : index
    %c0_16 = arith.constant 0 : index
    %20 = vector.load %arg9[%c0_15, %c0_16] : memref<1x256xf32, #tpu.memory_space<vmem>>, vector<1x256xf32>
    %21 = vector.broadcast %20 : vector<1x256xf32> to vector<8x256xf32>
    %22 = arith.addf %19, %21 : vector<8x256xf32>
    %cst_17 = arith.constant 0.000000e+00 : f32
    %23 = vector.broadcast %cst_17 : f32 to vector<8x256xf32>
    %24 = arith.maximumf %22, %23 : vector<8x256xf32>
    %25 = arith.truncf %24 : vector<8x256xf32> to vector<8x256xbf16>
    %c0_18 = arith.constant 0 : index
    %c0_19 = arith.constant 0 : index
    %26 = vector.load %arg5[%c0_18, %c0_19] : memref<256x128xbf16, #tpu.memory_space<vmem>>, vector<256x128xbf16>
    %cst_20 = arith.constant dense<0.000000e+00> : vector<8x128xf32>
    %27 = tpu.matmul %25, %26, %cst_20 {dimension_numbers = #tpu.dot_dimension_numbers<[1], [0], [0], [1], [0, 0, 1, 1], [], []>} : vector<8x256xbf16>, vector<256x128xbf16>, vector<8x128xf32> -> vector<8x128xf32>
    %c0_21 = arith.constant 0 : index
    %c0_22 = arith.constant 0 : index
    %28 = vector.load %arg10[%c0_21, %c0_22] : memref<1x128xf32, #tpu.memory_space<vmem>>, vector<1x128xf32>
    %29 = vector.broadcast %28 : vector<1x128xf32> to vector<8x128xf32>
    %30 = arith.addf %27, %29 : vector<8x128xf32>
    %cst_23 = arith.constant 0.000000e+00 : f32
    %31 = vector.broadcast %cst_23 : f32 to vector<8x128xf32>
    %32 = arith.maximumf %30, %31 : vector<8x128xf32>
    %33 = arith.truncf %32 : vector<8x128xf32> to vector<8x128xbf16>
    %c0_24 = arith.constant 0 : index
    %c0_25 = arith.constant 0 : index
    %34 = vector.load %arg6[%c0_24, %c0_25] : memref<128x128xbf16, #tpu.memory_space<vmem>>, vector<128x128xbf16>
    %cst_26 = arith.constant dense<0.000000e+00> : vector<8x128xf32>
    %35 = tpu.matmul %33, %34, %cst_26 {dimension_numbers = #tpu.dot_dimension_numbers<[1], [0], [0], [1], [0, 0, 1, 1], [], []>} : vector<8x128xbf16>, vector<128x128xbf16>, vector<8x128xf32> -> vector<8x128xf32>
    %c0_27 = arith.constant 0 : index
    %c0_28 = arith.constant 0 : index
    %36 = vector.load %arg11[%c0_27, %c0_28] : memref<1x128xf32, #tpu.memory_space<vmem>>, vector<1x128xf32>
    %37 = vector.broadcast %36 : vector<1x128xf32> to vector<8x128xf32>
    %38 = arith.addf %35, %37 : vector<8x128xf32>
    %c0_29 = arith.constant 0 : index
    %c0_30 = arith.constant 0 : index
    %39 = vector.load %arg12[%c0_29, %c0_30] : memref<8x128xf32, #tpu.memory_space<vmem>>, vector<8x128xf32>
    tpu.vector_store %arg12[%c0_29, %c0_30], %38 {strides = array<i32>} : memref<8x128xf32, #tpu.memory_space<vmem>>, vector<8x128xf32>,
    return
  }
  func.func @transform_0(%arg0: i32) -> (i32, i32) {
    %c0_i32 = arith.constant 0 : i32
    %c0_i32_0 = arith.constant 0 : i32
    return %arg0, %c0_i32 : i32, i32
  }
  func.func @transform_1(%arg0: i32) -> (i32, i32) {
    %c0_i32 = arith.constant 0 : i32
    %c0_i32_0 = arith.constant 0 : i32
    %c0_i32_1 = arith.constant 0 : i32
    return %c0_i32, %c0_i32_0 : i32, i32
  }
  func.func @transform_2(%arg0: i32) -> (i32, i32) {
    %c0_i32 = arith.constant 0 : i32
    %c0_i32_0 = arith.constant 0 : i32
    %c0_i32_1 = arith.constant 0 : i32
    return %c0_i32, %c0_i32_0 : i32, i32
  }
  func.func @transform_3(%arg0: i32) -> (i32, i32) {
    %c0_i32 = arith.constant 0 : i32
    %c0_i32_0 = arith.constant 0 : i32
    %c0_i32_1 = arith.constant 0 : i32
    return %c0_i32, %c0_i32_0 : i32, i32
  }
  func.func @transform_4(%arg0: i32) -> (i32, i32) {
    %c0_i32 = arith.constant 0 : i32
    %c0_i32_0 = arith.constant 0 : i32
    %c0_i32_1 = arith.constant 0 : i32
    return %c0_i32, %c0_i32_0 : i32, i32
  }
  func.func @transform_5(%arg0: i32) -> (i32, i32) {
    %c0_i32 = arith.constant 0 : i32
    %c0_i32_0 = arith.constant 0 : i32
    %c0_i32_1 = arith.constant 0 : i32
    return %c0_i32, %c0_i32_0 : i32, i32
  }
  func.func @transform_6(%arg0: i32) -> (i32, i32) {
    %c0_i32 = arith.constant 0 : i32
    %c0_i32_0 = arith.constant 0 : i32
    %c0_i32_1 = arith.constant 0 : i32
    return %c0_i32, %c0_i32_0 : i32, i32
  }
  func.func @transform_7(%arg0: i32) -> (i32, i32) {
    %c0_i32 = arith.constant 0 : i32
    %c0_i32_0 = arith.constant 0 : i32
    %c0_i32_1 = arith.constant 0 : i32
    return %c0_i32, %c0_i32_0 : i32, i32
  }
  func.func @transform_8(%arg0: i32) -> (i32, i32) {
    %c0_i32 = arith.constant 0 : i32
    %c0_i32_0 = arith.constant 0 : i32
    %c0_i32_1 = arith.constant 0 : i32
    return %c0_i32, %c0_i32_0 : i32, i32
  }
  func.func @transform_9(%arg0: i32) -> (i32, i32) {
    %c0_i32 = arith.constant 0 : i32
    %c0_i32_0 = arith.constant 0 : i32
    %c0_i32_1 = arith.constant 0 : i32
    return %c0_i32, %c0_i32_0 : i32, i32
  }
  func.func @transform_10(%arg0: i32) -> (i32, i32) {
    %c0_i32 = arith.constant 0 : i32
    %c0_i32_0 = arith.constant 0 : i32
    %c0_i32_1 = arith.constant 0 : i32
    return %c0_i32, %c0_i32_0 : i32, i32
  }
  func.func @transform_11(%arg0: i32) -> (i32, i32) {
    %c0_i32 = arith.constant 0 : i32
    %c0_i32_0 = arith.constant 0 : i32
    return %arg0, %c0_i32 : i32, i32
  }
}

</mosaic_0001>

<llo_original>
// kernel: _lambda_.1
$region0: #{_lambda_.1}
  #allocation0 [shape = 'u32[]', space=smem, size = 0x4, offset = 0x4, fixed_abs, tag = 'smem constant byte address 0x4 - core index']
  #allocation1 [shape = 'u32[72,128]{1,0:T(1,128)}', space=vmem, size = 0x9000, scoped, tag = 'internal scratch']
  %s0 = inlined_call_operand.vmem [shape: f32[8,784], index: 0, kind: input, shape index: {}]
  %s1 = inlined_call_operand.hbm [shape: bf16[784,520], index: 1, kind: input, shape index: {}]
  %s2 = inlined_call_operand.vmem [shape: bf16[520,320], index: 2, kind: input, shape index: {}]
  %s3 = inlined_call_operand.hbm [shape: bf16[320,256], index: 3, kind: input, shape index: {}]
  %s4 = inlined_call_operand.hbm [shape: bf16[256,128], index: 4, kind: input, shape index: {}]
  %s5 = inlined_call_operand.hbm [shape: bf16[128,128], index: 5, kind: input, shape index: {}]
  %s6 = inlined_call_operand.vmem [shape: f32[1,520], index: 6, kind: input, shape index: {}]
  %s7 = inlined_call_operand.vmem [shape: f32[1,320], index: 7, kind: input, shape index: {}]
  %s8 = inlined_call_operand.vmem [shape: f32[1,256], index: 8, kind: input, shape index: {}]
  %s9 = inlined_call_operand.vmem [shape: f32[1,128], index: 9, kind: input, shape index: {}]
  %s10 = inlined_call_operand.vmem [shape: f32[1,128], index: 10, kind: input, shape index: {}]
  %s11 = inlined_call_operand.hbm [shape: f32[8,128], index: 11, kind: output, shape index: {}]
  %s12 = sld [smem:[#allocation0]]
  $region70: #{_lambda_.1} parent=0
    _
  %s14 = ssub.s32 1, %s12
  %s15 = scalar_select 0, %s14, %s12
  $region1: #{_lambda_.1} parent=0
    #allocation2 [shape = 'u8[1003520]{0}', space=vmem, size = 0xf5000, scoped, tag = 'input window, operand 1, single buffered']
    #allocation3 [shape = 's32[1]{0}', space=sflag, size = 0x4, scoped, tag = 'scoped memory for _lambda_.1']
    #allocation4 [shape = 's32[1]{0}', space=sflag, size = 0x4, scoped, tag = 'scoped memory for _lambda_.1']
    #allocation5 [shape = 'u8[163840]{0}', space=vmem, size = 0x28000, scoped, tag = 'input window, operand 3, single buffered']
    #allocation6 [shape = 's32[1]{0}', space=sflag, size = 0x4, scoped, tag = 'scoped memory for _lambda_.1']
    #allocation7 [shape = 'u8[65536]{0}', space=vmem, size = 0x10000, scoped, tag = 'input window, operand 4, single buffered']
    #allocation8 [shape = 'u8[32768]{0}', space=vmem, size = 0x8000, scoped, tag = 'input window, operand 5, single buffered']
    #allocation9 [shape = 's32[1]{0}', space=sflag, size = 0x4, scoped, tag = 'scoped memory for _lambda_.1']
    #allocation10 [shape = 'u8[4096]{0}', space=vmem, size = 0x1000, scoped, tag = 'output window, operand 0, single buffered']
    %16 = vsyncpa [#allocation3], 0
    %17 = vsyncpa [#allocation6], 0
    %18 = vsyncpa [#allocation9], 0
    %19 = vsyncpa [#allocation4], 0
    // Predicated region
    $region2: #{_lambda_.1} parent=1 // pred_check
      _
    $region3: #{_lambda_.1} parent=1 // pred_check_branch
      %21 = sbr.rel (0) target = $region5
    $region4: #{_lambda_.1} parent=1 // pred_region
      _
    $region5: #{_lambda_.1} parent=1 // pred_fallthru
      _
    // Predicated region
    $region6: #{_lambda_.1} parent=1 // pred_check
      _
    $region7: #{_lambda_.1} parent=1 // pred_check_branch
      %23 = sbr.rel (0) target = $region9
    $region8: #{_lambda_.1} parent=1 // pred_region
      %25 = vsyncadd [#allocation3], 0
      %s26 = sshll.u32 %s1, 4
      %s27 = int_to_ptr.hbm [resolvable:$true] %s26
      %s28 = sshll.u32 [#allocation2], 4
      %s29 = int_to_ptr.vmem [resolvable:$true] %s28
      %34 = dma.hbm_to_vmem [thread:$0]  %s27, 31360, %s29, [#allocation3], 320, 320, 20
    $region9: #{_lambda_.1} parent=1 // pred_fallthru
      _
    // Predicated region
    $region10: #{_lambda_.1} parent=1 // pred_check
      _
    $region11: #{_lambda_.1} parent=1 // pred_check_branch
      %36 = sbr.rel (0) target = $region13
    $region12: #{_lambda_.1} parent=1 // pred_region
      _
    $region13: #{_lambda_.1} parent=1 // pred_fallthru
      _
    // Predicated region
    $region14: #{_lambda_.1} parent=1 // pred_check
      _
    $region15: #{_lambda_.1} parent=1 // pred_check_branch
      %38 = sbr.rel (0) target = $region17
    $region16: #{_lambda_.1} parent=1 // pred_region
      %40 = vsyncadd [#allocation6], 0
      %s41 = sshll.u32 %s3, 4
      %s42 = int_to_ptr.hbm [resolvable:$true] %s41
      %s43 = sshll.u32 [#allocation5], 4
      %s44 = int_to_ptr.vmem [resolvable:$true] %s43
      %49 = dma.hbm_to_vmem [thread:$0]  %s42, 5120, %s44, [#allocation6], 128, 128, 8
    $region17: #{_lambda_.1} parent=1 // pred_fallthru
      _
    // Predicated region
    $region18: #{_lambda_.1} parent=1 // pred_check
      _
    $region19: #{_lambda_.1} parent=1 // pred_check_branch
      %51 = sbr.rel (0) target = $region21
    $region20: #{_lambda_.1} parent=1 // pred_region
      %53 = vsyncadd [#allocation6], 0
      %s54 = sshll.u32 %s4, 4
      %s55 = int_to_ptr.hbm [resolvable:$true] %s54
      %s56 = sshll.u32 [#allocation7], 4
      %s57 = int_to_ptr.vmem [resolvable:$true] %s56
      %62 = dma.hbm_to_vmem [thread:$0]  %s55, 2048, %s57, [#allocation6], 64, 64, 4
    $region21: #{_lambda_.1} parent=1 // pred_fallthru
      _
    // Predicated region
    $region22: #{_lambda_.1} parent=1 // pred_check
      _
    $region23: #{_lambda_.1} parent=1 // pred_check_branch
      %64 = sbr.rel (0) target = $region25
    $region24: #{_lambda_.1} parent=1 // pred_region
      %66 = vsyncadd [#allocation9], 0
      %s67 = sshll.u32 %s5, 4
      %s68 = int_to_ptr.hbm [resolvable:$true] %s67
      %s69 = sshll.u32 [#allocation8], 4
      %s70 = int_to_ptr.vmem [resolvable:$true] %s69
      %75 = dma.hbm_to_vmem [thread:$0]  %s68, 1024, %s70, [#allocation9], 64, 64, 4
    $region25: #{_lambda_.1} parent=1 // pred_fallthru
      _
    // Predicated region
    $region26: #{_lambda_.1} parent=1 // pred_check
      _
    $region27: #{_lambda_.1} parent=1 // pred_check_branch
      %77 = sbr.rel (0) target = $region29
    $region28: #{_lambda_.1} parent=1 // pred_region
      _
    $region29: #{_lambda_.1} parent=1 // pred_fallthru
      _
    // Predicated region
    $region30: #{_lambda_.1} parent=1 // pred_check
      _
    $region31: #{_lambda_.1} parent=1 // pred_check_branch
      %79 = sbr.rel (0) target = $region33
    $region32: #{_lambda_.1} parent=1 // pred_region
      _
    $region33: #{_lambda_.1} parent=1 // pred_fallthru
      _
    // Predicated region
    $region34: #{_lambda_.1} parent=1 // pred_check
      _
    $region35: #{_lambda_.1} parent=1 // pred_check_branch
      %81 = sbr.rel (0) target = $region37
    $region36: #{_lambda_.1} parent=1 // pred_region
      _
    $region37: #{_lambda_.1} parent=1 // pred_fallthru
      _
    // Predicated region
    $region38: #{_lambda_.1} parent=1 // pred_check
      _
    $region39: #{_lambda_.1} parent=1 // pred_check_branch
      %83 = sbr.rel (0) target = $region41
    $region40: #{_lambda_.1} parent=1 // pred_region
      _
    $region41: #{_lambda_.1} parent=1 // pred_fallthru
      _
    // Predicated region
    $region42: #{_lambda_.1} parent=1 // pred_check
      _
    $region43: #{_lambda_.1} parent=1 // pred_check_branch
      %85 = sbr.rel (0) target = $region45
    $region44: #{_lambda_.1} parent=1 // pred_region
      _
    $region45: #{_lambda_.1} parent=1 // pred_fallthru
      _
    // Predicated region
    $region46: #{_lambda_.1} parent=1 // pred_check
      _
    $region47: #{_lambda_.1} parent=1 // pred_check_branch
      %87 = sbr.rel (0) target = $region49
    $region48: #{_lambda_.1} parent=1 // pred_region
      %89 = dma.done [#allocation3], 31360
    $region49: #{_lambda_.1} parent=1 // pred_fallthru
      _
    // Predicated region
    $region50: #{_lambda_.1} parent=1 // pred_check
      _
    $region51: #{_lambda_.1} parent=1 // pred_check_branch
      %91 = sbr.rel (0) target = $region53
    $region52: #{_lambda_.1} parent=1 // pred_region
      %93 = dma.done [#allocation6], 5120
    $region53: #{_lambda_.1} parent=1 // pred_fallthru
      _
    // Predicated region
    $region54: #{_lambda_.1} parent=1 // pred_check
      _
    $region55: #{_lambda_.1} parent=1 // pred_check_branch
      %95 = sbr.rel (0) target = $region57
    $region56: #{_lambda_.1} parent=1 // pred_region
      %97 = dma.done [#allocation6], 2048
    $region57: #{_lambda_.1} parent=1 // pred_fallthru
      _
    // Predicated region
    $region58: #{_lambda_.1} parent=1 // pred_check
      _
    $region59: #{_lambda_.1} parent=1 // pred_check_branch
      %99 = sbr.rel (0) target = $region61
    $region60: #{_lambda_.1} parent=1 // pred_region
      %101 = dma.done [#allocation9], 1024
    $region61: #{_lambda_.1} parent=1 // pred_fallthru
      _
    %v103 = vld [vmem:[%s0] sm:$0xff]
    %v104 = vld [vmem:[%s0 + $0x8] sm:$0xff]
    %v105 = vld [vmem:[%s0 + $0x10] sm:$0xff]
    %v106 = vld [vmem:[%s0 + $0x18] sm:$0xff]
    %v107 = vld [vmem:[%s0 + $0x20] sm:$0xff]
    %v108 = vld [vmem:[%s0 + $0x28] sm:$0xff]
    %v109 = vld [vmem:[%s0 + $0x30] sm:$0xff]
    %v110 = vpack.c.bf16 %v103, %v103
    %v111 = vpack.c.bf16 %v104, %v104
    %v112 = vpack.c.bf16 %v105, %v105
    %v113 = vpack.c.bf16 %v106, %v106
    %v114 = vpack.c.bf16 %v107, %v107
    %v115 = vpack.c.bf16 %v108, %v108
    %v116 = vpack.c.bf16 %v109, %v109
    %v117 = vld [vmem:[#allocation2] sm:$0xff]
    %v118 = vld [vmem:[#allocation2 + $0x8] sm:$0xff]
    %v119 = vld [vmem:[#allocation2 + $0x10] sm:$0xf]
    %v120 = vld [vmem:[#allocation2 + $0x14] sm:$0xff]
    %v121 = vld [vmem:[#allocation2 + $0x1c] sm:$0xff]
    %v122 = vld [vmem:[#allocation2 + $0x24] sm:$0xf]
    %v123 = vld [vmem:[#allocation2 + $0x28] sm:$0xff]
    %v124 = vld [vmem:[#allocation2 + $0x30] sm:$0xff]
    %v125 = vld [vmem:[#allocation2 + $0x38] sm:$0xf]
    %v126 = vld [vmem:[#allocation2 + $0x3c] sm:$0xff]
    %v127 = vld [vmem:[#allocation2 + $0x44] sm:$0xff]
    %v128 = vld [vmem:[#allocation2 + $0x4c] sm:$0xf]
    %v129 = vld [vmem:[#allocation2 + $0x50] sm:$0xff]
    %v130 = vld [vmem:[#allocation2 + $0x58] sm:$0xff]
    %v131 = vld [vmem:[#allocation2 + $0x60] sm:$0xf]
    %v132 = vld [vmem:[#allocation2 + $0x64] sm:$0xff]
    %v133 = vld [vmem:[#allocation2 + $0x6c] sm:$0xff]
    %v134 = vld [vmem:[#allocation2 + $0x74] sm:$0xf]
    %v135 = vld [vmem:[#allocation2 + $0x78] sm:$0xff]
    %v136 = vld [vmem:[#allocation2 + $0x80] sm:$0xff]
    %v137 = vld [vmem:[#allocation2 + $0x88] sm:$0xf]
    %v138 = vld [vmem:[#allocation2 + $0x8c] sm:$0xff]
    %v139 = vld [vmem:[#allocation2 + $0x94] sm:$0xff]
    %v140 = vld [vmem:[#allocation2 + $0x9c] sm:$0xf]
    %v141 = vld [vmem:[#allocation2 + $0xa0] sm:$0xff]
    %v142 = vld [vmem:[#allocation2 + $0xa8] sm:$0xff]
    %v143 = vld [vmem:[#allocation2 + $0xb0] sm:$0xf]
    %v144 = vld [vmem:[#allocation2 + $0xb4] sm:$0xff]
    %v145 = vld [vmem:[#allocation2 + $0xbc] sm:$0xff]
    %v146 = vld [vmem:[#allocation2 + $0xc4] sm:$0xf]
    %v147 = vld [vmem:[#allocation2 + $0xc8] sm:$0xff]
    %v148 = vld [vmem:[#allocation2 + $0xd0] sm:$0xff]
    %v149 = vld [vmem:[#allocation2 + $0xd8] sm:$0xf]
    %v150 = vld [vmem:[#allocation2 + $0xdc] sm:$0xff]
    %v151 = vld [vmem:[#allocation2 + $0xe4] sm:$0xff]
    %v152 = vld [vmem:[#allocation2 + $0xec] sm:$0xf]
    %v153 = vld [vmem:[#allocation2 + $0xf0] sm:$0xff]
    %v154 = vld [vmem:[#allocation2 + $0xf8] sm:$0xff]
    %v155 = vld [vmem:[#allocation2 + $0x100] sm:$0xf]
    %v156 = vld [vmem:[#allocation2 + $0x104] sm:$0xff]
    %v157 = vld [vmem:[#allocation2 + $0x10c] sm:$0xff]
    %v158 = vld [vmem:[#allocation2 + $0x114] sm:$0xf]
    %v159 = vld [vmem:[#allocation2 + $0x118] sm:$0xff]
    %v160 = vld [vmem:[#allocation2 + $0x120] sm:$0xff]
    %v161 = vld [vmem:[#allocation2 + $0x128] sm:$0xf]
    %v162 = vld [vmem:[#allocation2 + $0x12c] sm:$0xff]
    %v163 = vld [vmem:[#allocation2 + $0x134] sm:$0xff]
    %v164 = vld [vmem:[#allocation2 + $0x13c] sm:$0xf]
    %v165 = vld [vmem:[#allocation2 + $0x140] sm:$0xff]
    %v166 = vld [vmem:[#allocation2 + $0x148] sm:$0xff]
    %v167 = vld [vmem:[#allocation2 + $0x150] sm:$0xf]
    %v168 = vld [vmem:[#allocation2 + $0x154] sm:$0xff]
    %v169 = vld [vmem:[#allocation2 + $0x15c] sm:$0xff]
    %v170 = vld [vmem:[#allocation2 + $0x164] sm:$0xf]
    %v171 = vld [vmem:[#allocation2 + $0x168] sm:$0xff]
    %v172 = vld [vmem:[#allocation2 + $0x170] sm:$0xff]
    %v173 = vld [vmem:[#allocation2 + $0x178] sm:$0xf]
    %v174 = vld [vmem:[#allocation2 + $0x17c] sm:$0xff]
    %v175 = vld [vmem:[#allocation2 + $0x184] sm:$0xff]
    %v176 = vld [vmem:[#allocation2 + $0x18c] sm:$0xf]
    %v177 = vld [vmem:[#allocation2 + $0x190] sm:$0xff]
    %v178 = vld [vmem:[#allocation2 + $0x198] sm:$0xff]
    %v179 = vld [vmem:[#allocation2 + $0x1a0] sm:$0xf]
    %v180 = vld [vmem:[#allocation2 + $0x1a4] sm:$0xff]
    %v181 = vld [vmem:[#allocation2 + $0x1ac] sm:$0xff]
    %v182 = vld [vmem:[#allocation2 + $0x1b4] sm:$0xf]
    %v183 = vld [vmem:[#allocation2 + $0x1b8] sm:$0xff]
    %v184 = vld [vmem:[#allocation2 + $0x1c0] sm:$0xff]
    %v185 = vld [vmem:[#allocation2 + $0x1c8] sm:$0xf]
    %v186 = vld [vmem:[#allocation2 + $0x1cc] sm:$0xff]
    %v187 = vld [vmem:[#allocation2 + $0x1d4] sm:$0xff]
    %v188 = vld [vmem:[#allocation2 + $0x1dc] sm:$0xf]
    %v189 = vld [vmem:[#allocation2 + $0x1e0] sm:$0xff]
    %v190 = vld [vmem:[#allocation2 + $0x1e8] sm:$0xff]
    %v191 = vld [vmem:[#allocation2 + $0x1f0] sm:$0xf]
    %v192 = vld [vmem:[#allocation2 + $0x1f4] sm:$0xff]
    %v193 = vld [vmem:[#allocation2 + $0x1fc] sm:$0xff]
    %v194 = vld [vmem:[#allocation2 + $0x204] sm:$0xf]
    %v195 = vld [vmem:[#allocation2 + $0x208] sm:$0xff]
    %v196 = vld [vmem:[#allocation2 + $0x210] sm:$0xff]
    %v197 = vld [vmem:[#allocation2 + $0x218] sm:$0xf]
    %v198 = vld [vmem:[#allocation2 + $0x21c] sm:$0xff]
    %v199 = vld [vmem:[#allocation2 + $0x224] sm:$0xff]
    %v200 = vld [vmem:[#allocation2 + $0x22c] sm:$0xf]
    %v201 = vld [vmem:[#allocation2 + $0x230] sm:$0xff]
    %v202 = vld [vmem:[#allocation2 + $0x238] sm:$0xff]
    %v203 = vld [vmem:[#allocation2 + $0x240] sm:$0xf]
    %v204 = vld [vmem:[#allocation2 + $0x244] sm:$0xff]
    %v205 = vld [vmem:[#allocation2 + $0x24c] sm:$0xff]
    %v206 = vld [vmem:[#allocation2 + $0x254] sm:$0xf]
    %v207 = vld [vmem:[#allocation2 + $0x258] sm:$0xff]
    %v208 = vld [vmem:[#allocation2 + $0x260] sm:$0xff]
    %v209 = vld [vmem:[#allocation2 + $0x268] sm:$0xf]
    %v210 = vld [vmem:[#allocation2 + $0x26c] sm:$0xff]
    %v211 = vld [vmem:[#allocation2 + $0x274] sm:$0xff]
    %v212 = vld [vmem:[#allocation2 + $0x27c] sm:$0xf]
    %v213 = vld [vmem:[#allocation2 + $0x280] sm:$0xff]
    %v214 = vld [vmem:[#allocation2 + $0x288] sm:$0xff]
    %v215 = vld [vmem:[#allocation2 + $0x290] sm:$0xf]
    %v216 = vld [vmem:[#allocation2 + $0x294] sm:$0xff]
    %v217 = vld [vmem:[#allocation2 + $0x29c] sm:$0xff]
    %v218 = vld [vmem:[#allocation2 + $0x2a4] sm:$0xf]
    %v219 = vld [vmem:[#allocation2 + $0x2a8] sm:$0xff]
    %v220 = vld [vmem:[#allocation2 + $0x2b0] sm:$0xff]
    %v221 = vld [vmem:[#allocation2 + $0x2b8] sm:$0xf]
    %v222 = vld [vmem:[#allocation2 + $0x2bc] sm:$0xff]
    %v223 = vld [vmem:[#allocation2 + $0x2c4] sm:$0xff]
    %v224 = vld [vmem:[#allocation2 + $0x2cc] sm:$0xf]
    %v225 = vld [vmem:[#allocation2 + $0x2d0] sm:$0xff]
    %v226 = vld [vmem:[#allocation2 + $0x2d8] sm:$0xff]
    %v227 = vld [vmem:[#allocation2 + $0x2e0] sm:$0xf]
    %v228 = vld [vmem:[#allocation2 + $0x2e4] sm:$0xff]
    %v229 = vld [vmem:[#allocation2 + $0x2ec] sm:$0xff]
    %v230 = vld [vmem:[#allocation2 + $0x2f4] sm:$0xf]
    %v231 = vld [vmem:[#allocation2 + $0x2f8] sm:$0xff]
    %v232 = vld [vmem:[#allocation2 + $0x300] sm:$0xff]
    %v233 = vld [vmem:[#allocation2 + $0x308] sm:$0xf]
    %v234 = vld [vmem:[#allocation2 + $0x30c] sm:$0xff]
    %v235 = vld [vmem:[#allocation2 + $0x314] sm:$0xff]
    %v236 = vld [vmem:[#allocation2 + $0x31c] sm:$0xf]
    %v237 = vld [vmem:[#allocation2 + $0x320] sm:$0xff]
    %v238 = vld [vmem:[#allocation2 + $0x328] sm:$0xff]
    %v239 = vld [vmem:[#allocation2 + $0x330] sm:$0xf]
    %v240 = vld [vmem:[#allocation2 + $0x334] sm:$0xff]
    %v241 = vld [vmem:[#allocation2 + $0x33c] sm:$0xff]
    %v242 = vld [vmem:[#allocation2 + $0x344] sm:$0xf]
    %v243 = vld [vmem:[#allocation2 + $0x348] sm:$0xff]
    %v244 = vld [vmem:[#allocation2 + $0x350] sm:$0xff]
    %v245 = vld [vmem:[#allocation2 + $0x358] sm:$0xf]
    %v246 = vld [vmem:[#allocation2 + $0x35c] sm:$0xff]
    %v247 = vld [vmem:[#allocation2 + $0x364] sm:$0xff]
    %v248 = vld [vmem:[#allocation2 + $0x36c] sm:$0xf]
    %v249 = vld [vmem:[#allocation2 + $0x370] sm:$0xff]
    %v250 = vld [vmem:[#allocation2 + $0x378] sm:$0xff]
    %v251 = vld [vmem:[#allocation2 + $0x380] sm:$0xf]
    %v252 = vld [vmem:[#allocation2 + $0x384] sm:$0xff]
    %v253 = vld [vmem:[#allocation2 + $0x38c] sm:$0xff]
    %v254 = vld [vmem:[#allocation2 + $0x394] sm:$0xf]
    %v255 = vld [vmem:[#allocation2 + $0x398] sm:$0xff]
    %v256 = vld [vmem:[#allocation2 + $0x3a0] sm:$0xff]
    %v257 = vld [vmem:[#allocation2 + $0x3a8] sm:$0xf]
    %v258 = vld [vmem:[#allocation2 + $0x3ac] sm:$0xff]
    %v259 = vld [vmem:[#allocation2 + $0x3b4] sm:$0xff]
    %v260 = vld [vmem:[#allocation2 + $0x3bc] sm:$0xf]
    %v261 = vld [vmem:[#allocation2 + $0x3c0] sm:$0xff]
    %v262 = vld [vmem:[#allocation2 + $0x3c8] sm:$0xff]
    %v263 = vld [vmem:[#allocation2 + $0x3d0] sm:$0xf]
    %v264 = vld [vmem:[#allocation2 + $0x3d4] sm:$0xff]
    %v265 = vld [vmem:[#allocation2 + $0x3dc] sm:$0xff]
    %v266 = vld [vmem:[#allocation2 + $0x3e4] sm:$0xf]
    %v267 = vld [vmem:[#allocation2 + $0x3e8] sm:$0xff]
    %v268 = vld [vmem:[#allocation2 + $0x3f0] sm:$0xff]
    %v269 = vld [vmem:[#allocation2 + $0x3f8] sm:$0xf]
    %v270 = vld [vmem:[#allocation2 + $0x3fc] sm:$0xff]
    %v271 = vld [vmem:[#allocation2 + $0x404] sm:$0xff]
    %v272 = vld [vmem:[#allocation2 + $0x40c] sm:$0xf]
    %v273 = vld [vmem:[#allocation2 + $0x410] sm:$0xff]
    %v274 = vld [vmem:[#allocation2 + $0x418] sm:$0xff]
    %v275 = vld [vmem:[#allocation2 + $0x420] sm:$0xf]
    %v276 = vld [vmem:[#allocation2 + $0x424] sm:$0xff]
    %v277 = vld [vmem:[#allocation2 + $0x42c] sm:$0xff]
    %v278 = vld [vmem:[#allocation2 + $0x434] sm:$0xf]
    %v279 = vld [vmem:[#allocation2 + $0x438] sm:$0xff]
    %v280 = vld [vmem:[#allocation2 + $0x440] sm:$0xff]
    %v281 = vld [vmem:[#allocation2 + $0x448] sm:$0xf]
    %v282 = vld [vmem:[#allocation2 + $0x44c] sm:$0xff]
    %v283 = vld [vmem:[#allocation2 + $0x454] sm:$0xff]
    %v284 = vld [vmem:[#allocation2 + $0x45c] sm:$0xf]
    %v285 = vld [vmem:[#allocation2 + $0x460] sm:$0xff]
    %v286 = vld [vmem:[#allocation2 + $0x468] sm:$0xff]
    %v287 = vld [vmem:[#allocation2 + $0x470] sm:$0xf]
    %v288 = vld [vmem:[#allocation2 + $0x474] sm:$0xff]
    %v289 = vld [vmem:[#allocation2 + $0x47c] sm:$0xff]
    %v290 = vld [vmem:[#allocation2 + $0x484] sm:$0xf]
    %v291 = vld [vmem:[#allocation2 + $0x488] sm:$0xff]
    %v292 = vld [vmem:[#allocation2 + $0x490] sm:$0xff]
    %v293 = vld [vmem:[#allocation2 + $0x498] sm:$0xf]
    %v294 = vld [vmem:[#allocation2 + $0x49c] sm:$0xff]
    %v295 = vld [vmem:[#allocation2 + $0x4a4] sm:$0xff]
    %v296 = vld [vmem:[#allocation2 + $0x4ac] sm:$0xf]
    %v297 = vld [vmem:[#allocation2 + $0x4b0] sm:$0xff]
    %v298 = vld [vmem:[#allocation2 + $0x4b8] sm:$0xff]
    %v299 = vld [vmem:[#allocation2 + $0x4c0] sm:$0xf]
    %v300 = vld [vmem:[#allocation2 + $0x4c4] sm:$0xff]
    %v301 = vld [vmem:[#allocation2 + $0x4cc] sm:$0xff]
    %v302 = vld [vmem:[#allocation2 + $0x4d4] sm:$0xf]
    %v303 = vld [vmem:[#allocation2 + $0x4d8] sm:$0xff]
    %v304 = vld [vmem:[#allocation2 + $0x4e0] sm:$0xff]
    %v305 = vld [vmem:[#allocation2 + $0x4e8] sm:$0xf]
    %v306 = vld [vmem:[#allocation2 + $0x4ec] sm:$0xff]
    %v307 = vld [vmem:[#allocation2 + $0x4f4] sm:$0xff]
    %v308 = vld [vmem:[#allocation2 + $0x4fc] sm:$0xf]
    %v309 = vld [vmem:[#allocation2 + $0x500] sm:$0xff]
    %v310 = vld [vmem:[#allocation2 + $0x508] sm:$0xff]
    %v311 = vld [vmem:[#allocation2 + $0x510] sm:$0xf]
    %v312 = vld [vmem:[#allocation2 + $0x514] sm:$0xff]
    %v313 = vld [vmem:[#allocation2 + $0x51c] sm:$0xff]
    %v314 = vld [vmem:[#allocation2 + $0x524] sm:$0xf]
    %v315 = vld [vmem:[#allocation2 + $0x528] sm:$0xff]
    %v316 = vld [vmem:[#allocation2 + $0x530] sm:$0xff]
    %v317 = vld [vmem:[#allocation2 + $0x538] sm:$0xf]
    %v318 = vld [vmem:[#allocation2 + $0x53c] sm:$0xff]
    %v319 = vld [vmem:[#allocation2 + $0x544] sm:$0xff]
    %v320 = vld [vmem:[#allocation2 + $0x54c] sm:$0xf]
    %v321 = vld [vmem:[#allocation2 + $0x550] sm:$0xff]
    %v322 = vld [vmem:[#allocation2 + $0x558] sm:$0xff]
    %v323 = vld [vmem:[#allocation2 + $0x560] sm:$0xf]
    %v324 = vld [vmem:[#allocation2 + $0x564] sm:$0xff]
    %v325 = vld [vmem:[#allocation2 + $0x56c] sm:$0xff]
    %v326 = vld [vmem:[#allocation2 + $0x574] sm:$0xf]
    %v327 = vld [vmem:[#allocation2 + $0x578] sm:$0xff]
    %v328 = vld [vmem:[#allocation2 + $0x580] sm:$0xff]
    %v329 = vld [vmem:[#allocation2 + $0x588] sm:$0xf]
    %v330 = vld [vmem:[#allocation2 + $0x58c] sm:$0xff]
    %v331 = vld [vmem:[#allocation2 + $0x594] sm:$0xff]
    %v332 = vld [vmem:[#allocation2 + $0x59c] sm:$0xf]
    %v333 = vld [vmem:[#allocation2 + $0x5a0] sm:$0xff]
    %v334 = vld [vmem:[#allocation2 + $0x5a8] sm:$0xff]
    %v335 = vld [vmem:[#allocation2 + $0x5b0] sm:$0xf]
    %v336 = vld [vmem:[#allocation2 + $0x5b4] sm:$0xff]
    %v337 = vld [vmem:[#allocation2 + $0x5bc] sm:$0xff]
    %v338 = vld [vmem:[#allocation2 + $0x5c4] sm:$0xf]
    %v339 = vld [vmem:[#allocation2 + $0x5c8] sm:$0xff]
    %v340 = vld [vmem:[#allocation2 + $0x5d0] sm:$0xff]
    %v341 = vld [vmem:[#allocation2 + $0x5d8] sm:$0xf]
    %v342 = vld [vmem:[#allocation2 + $0x5dc] sm:$0xff]
    %v343 = vld [vmem:[#allocation2 + $0x5e4] sm:$0xff]
    %v344 = vld [vmem:[#allocation2 + $0x5ec] sm:$0xf]
    %v345 = vld [vmem:[#allocation2 + $0x5f0] sm:$0xff]
    %v346 = vld [vmem:[#allocation2 + $0x5f8] sm:$0xff]
    %v347 = vld [vmem:[#allocation2 + $0x600] sm:$0xf]
    %v348 = vld [vmem:[#allocation2 + $0x604] sm:$0xff]
    %v349 = vld [vmem:[#allocation2 + $0x60c] sm:$0xff]
    %v350 = vld [vmem:[#allocation2 + $0x614] sm:$0xf]
    %v351 = vld [vmem:[#allocation2 + $0x618] sm:$0xff]
    %v352 = vld [vmem:[#allocation2 + $0x620] sm:$0xff]
    %v353 = vld [vmem:[#allocation2 + $0x628] sm:$0xf]
    %v354 = vld [vmem:[#allocation2 + $0x62c] sm:$0xff]
    %v355 = vld [vmem:[#allocation2 + $0x634] sm:$0xff]
    %v356 = vld [vmem:[#allocation2 + $0x63c] sm:$0xf]
    %v357 = vld [vmem:[#allocation2 + $0x640] sm:$0xff]
    %v358 = vld [vmem:[#allocation2 + $0x648] sm:$0xff]
    %v359 = vld [vmem:[#allocation2 + $0x650] sm:$0xf]
    %v360 = vld [vmem:[#allocation2 + $0x654] sm:$0xff]
    %v361 = vld [vmem:[#allocation2 + $0x65c] sm:$0xff]
    %v362 = vld [vmem:[#allocation2 + $0x664] sm:$0xf]
    %v363 = vld [vmem:[#allocation2 + $0x668] sm:$0xff]
    %v364 = vld [vmem:[#allocation2 + $0x670] sm:$0xff]
    %v365 = vld [vmem:[#allocation2 + $0x678] sm:$0xf]
    %v366 = vld [vmem:[#allocation2 + $0x67c] sm:$0xff]
    %v367 = vld [vmem:[#allocation2 + $0x684] sm:$0xff]
    %v368 = vld [vmem:[#allocation2 + $0x68c] sm:$0xf]
    %v369 = vld [vmem:[#allocation2 + $0x690] sm:$0xff]
    %v370 = vld [vmem:[#allocation2 + $0x698] sm:$0xff]
    %v371 = vld [vmem:[#allocation2 + $0x6a0] sm:$0xf]
    %v372 = vld [vmem:[#allocation2 + $0x6a4] sm:$0xff]
    %v373 = vld [vmem:[#allocation2 + $0x6ac] sm:$0xff]
    %v374 = vld [vmem:[#allocation2 + $0x6b4] sm:$0xf]
    %v375 = vld [vmem:[#allocation2 + $0x6b8] sm:$0xff]
    %v376 = vld [vmem:[#allocation2 + $0x6c0] sm:$0xff]
    %v377 = vld [vmem:[#allocation2 + $0x6c8] sm:$0xf]
    %v378 = vld [vmem:[#allocation2 + $0x6cc] sm:$0xff]
    %v379 = vld [vmem:[#allocation2 + $0x6d4] sm:$0xff]
    %v380 = vld [vmem:[#allocation2 + $0x6dc] sm:$0xf]
    %v381 = vld [vmem:[#allocation2 + $0x6e0] sm:$0xff]
    %v382 = vld [vmem:[#allocation2 + $0x6e8] sm:$0xff]
    %v383 = vld [vmem:[#allocation2 + $0x6f0] sm:$0xf]
    %v384 = vld [vmem:[#allocation2 + $0x6f4] sm:$0xff]
    %v385 = vld [vmem:[#allocation2 + $0x6fc] sm:$0xff]
    %v386 = vld [vmem:[#allocation2 + $0x704] sm:$0xf]
    %v387 = vld [vmem:[#allocation2 + $0x708] sm:$0xff]
    %v388 = vld [vmem:[#allocation2 + $0x710] sm:$0xff]
    %v389 = vld [vmem:[#allocation2 + $0x718] sm:$0xf]
    %v390 = vld [vmem:[#allocation2 + $0x71c] sm:$0xff]
    %v391 = vld [vmem:[#allocation2 + $0x724] sm:$0xff]
    %v392 = vld [vmem:[#allocation2 + $0x72c] sm:$0xf]
    %v393 = vld [vmem:[#allocation2 + $0x730] sm:$0xff]
    %v394 = vld [vmem:[#allocation2 + $0x738] sm:$0xff]
    %v395 = vld [vmem:[#allocation2 + $0x740] sm:$0xf]
    %v396 = vld [vmem:[#allocation2 + $0x744] sm:$0xff]
    %v397 = vld [vmem:[#allocation2 + $0x74c] sm:$0xff]
    %v398 = vld [vmem:[#allocation2 + $0x754] sm:$0xf]
    %v399 = vld [vmem:[#allocation2 + $0x758] sm:$0xff]
    %v400 = vld [vmem:[#allocation2 + $0x760] sm:$0xff]
    %v401 = vld [vmem:[#allocation2 + $0x768] sm:$0xf]
    %v402 = vld [vmem:[#allocation2 + $0x76c] sm:$0xff]
    %v403 = vld [vmem:[#allocation2 + $0x774] sm:$0xff]
    %v404 = vld [vmem:[#allocation2 + $0x77c] sm:$0xf]
    %v405 = vld [vmem:[#allocation2 + $0x780] sm:$0xff]
    %v406 = vld [vmem:[#allocation2 + $0x788] sm:$0xff]
    %v407 = vld [vmem:[#allocation2 + $0x790] sm:$0xf]
    %v408 = vld [vmem:[#allocation2 + $0x794] sm:$0xff]
    %v409 = vld [vmem:[#allocation2 + $0x79c] sm:$0xff]
    %v410 = vld [vmem:[#allocation2 + $0x7a4] sm:$0xf]
    %v411 = vld [vmem:[%s6] sm:$0x1f]
    %v413 = vperm.slane %v411, 0
    %v414 = vperm.slane %v411, 1
    %v415 = vperm.slane %v411, 2
    %v416 = vperm.slane %v411, 3
    %v417 = vperm.slane %v411, 4
    %v717 = vunpack.c.l.b16 %v117
    %v718 = vunpack.c.h.b16 %v117
    %v719 = vunpack.c.l.b16 %v118
    %v720 = vunpack.c.h.b16 %v118
    %v721 = vunpack.c.l.b16 %v119
    %v722 = vunpack.c.l.b16 %v120
    %v723 = vunpack.c.h.b16 %v120
    %v724 = vunpack.c.l.b16 %v121
    %v725 = vunpack.c.h.b16 %v121
    %v726 = vunpack.c.l.b16 %v122
    %v727 = vunpack.c.l.b16 %v123
    %v728 = vunpack.c.h.b16 %v123
    %v729 = vunpack.c.l.b16 %v124
    %v730 = vunpack.c.h.b16 %v124
    %v731 = vunpack.c.l.b16 %v125
    %v732 = vunpack.c.l.b16 %v126
    %v733 = vunpack.c.h.b16 %v126
    %v734 = vunpack.c.l.b16 %v127
    %v735 = vunpack.c.h.b16 %v127
    %v736 = vunpack.c.l.b16 %v128
    %v737 = vunpack.c.l.b16 %v129
    %v738 = vunpack.c.h.b16 %v129
    %v739 = vunpack.c.l.b16 %v130
    %v740 = vunpack.c.h.b16 %v130
    %v741 = vunpack.c.l.b16 %v131
    %v742 = vunpack.c.l.b16 %v132
    %v743 = vunpack.c.h.b16 %v132
    %v744 = vunpack.c.l.b16 %v133
    %v745 = vunpack.c.h.b16 %v133
    %v746 = vunpack.c.l.b16 %v134
    %v747 = vunpack.c.l.b16 %v135
    %v748 = vunpack.c.h.b16 %v135
    %v749 = vunpack.c.l.b16 %v136
    %v750 = vunpack.c.h.b16 %v136
    %v751 = vunpack.c.l.b16 %v137
    %v752 = vunpack.c.l.b16 %v138
    %v753 = vunpack.c.h.b16 %v138
    %v754 = vunpack.c.l.b16 %v139
    %v755 = vunpack.c.h.b16 %v139
    %v756 = vunpack.c.l.b16 %v140
    %v757 = vunpack.c.l.b16 %v141
    %v758 = vunpack.c.h.b16 %v141
    %v759 = vunpack.c.l.b16 %v142
    %v760 = vunpack.c.h.b16 %v142
    %v761 = vunpack.c.l.b16 %v143
    %v762 = vunpack.c.l.b16 %v144
    %v763 = vunpack.c.h.b16 %v144
    %v764 = vunpack.c.l.b16 %v145
    %v765 = vunpack.c.h.b16 %v145
    %v766 = vunpack.c.l.b16 %v146
    %v767 = vunpack.c.l.b16 %v147
    %v768 = vunpack.c.h.b16 %v147
    %v769 = vunpack.c.l.b16 %v148
    %v770 = vunpack.c.h.b16 %v148
    %v771 = vunpack.c.l.b16 %v149
    %v772 = vunpack.c.l.b16 %v150
    %v773 = vunpack.c.h.b16 %v150
    %v774 = vunpack.c.l.b16 %v151
    %v775 = vunpack.c.h.b16 %v151
    %v776 = vunpack.c.l.b16 %v152
    %v777 = vunpack.c.l.b16 %v153
    %v778 = vunpack.c.h.b16 %v153
    %v779 = vunpack.c.l.b16 %v154
    %v780 = vunpack.c.h.b16 %v154
    %v781 = vunpack.c.l.b16 %v155
    %v782 = vunpack.c.l.b16 %v156
    %v783 = vunpack.c.h.b16 %v156
    %v784 = vunpack.c.l.b16 %v157
    %v785 = vunpack.c.h.b16 %v157
    %v786 = vunpack.c.l.b16 %v158
    %v787 = vunpack.c.l.b16 %v159
    %v788 = vunpack.c.h.b16 %v159
    %v789 = vunpack.c.l.b16 %v160
    %v790 = vunpack.c.h.b16 %v160
    %v791 = vunpack.c.l.b16 %v161
    %v792 = vunpack.c.l.b16 %v162
    %v793 = vunpack.c.h.b16 %v162
    %v794 = vunpack.c.l.b16 %v163
    %v795 = vunpack.c.h.b16 %v163
    %v796 = vunpack.c.l.b16 %v164
    %v797 = vunpack.c.l.b16 %v165
    %v798 = vunpack.c.h.b16 %v165
    %v799 = vunpack.c.l.b16 %v166
    %v800 = vunpack.c.h.b16 %v166
    %v801 = vunpack.c.l.b16 %v167
    %v802 = vunpack.c.l.b16 %v168
    %v803 = vunpack.c.h.b16 %v168
    %v804 = vunpack.c.l.b16 %v169
    %v805 = vunpack.c.h.b16 %v169
    %v806 = vunpack.c.l.b16 %v170
    %v807 = vunpack.c.l.b16 %v171
    %v808 = vunpack.c.h.b16 %v171
    %v809 = vunpack.c.l.b16 %v172
    %v810 = vunpack.c.h.b16 %v172
    %v811 = vunpack.c.l.b16 %v173
    %v812 = vunpack.c.l.b16 %v174
    %v813 = vunpack.c.h.b16 %v174
    %v814 = vunpack.c.l.b16 %v175
    %v815 = vunpack.c.h.b16 %v175
    %v816 = vunpack.c.l.b16 %v176
    %v817 = vunpack.c.l.b16 %v177
    %v818 = vunpack.c.h.b16 %v177
    %v819 = vunpack.c.l.b16 %v178
    %v820 = vunpack.c.h.b16 %v178
    %v821 = vunpack.c.l.b16 %v179
    %v822 = vunpack.c.l.b16 %v180
    %v823 = vunpack.c.h.b16 %v180
    %v824 = vunpack.c.l.b16 %v181
    %v825 = vunpack.c.h.b16 %v181
    %v826 = vunpack.c.l.b16 %v182
    %v827 = vunpack.c.l.b16 %v183
    %v828 = vunpack.c.h.b16 %v183
    %v829 = vunpack.c.l.b16 %v184
    %v830 = vunpack.c.h.b16 %v184
    %v831 = vunpack.c.l.b16 %v185
    %v832 = vunpack.c.l.b16 %v186
    %v833 = vunpack.c.h.b16 %v186
    %v834 = vunpack.c.l.b16 %v187
    %v835 = vunpack.c.h.b16 %v187
    %v836 = vunpack.c.l.b16 %v188
    %v837 = vunpack.c.l.b16 %v189
    %v838 = vunpack.c.h.b16 %v189
    %v839 = vunpack.c.l.b16 %v190
    %v840 = vunpack.c.h.b16 %v190
    %v841 = vunpack.c.l.b16 %v191
    %v842 = vunpack.c.l.b16 %v192
    %v843 = vunpack.c.h.b16 %v192
    %v844 = vunpack.c.l.b16 %v193
    %v845 = vunpack.c.h.b16 %v193
    %v846 = vunpack.c.l.b16 %v194
    %v847 = vunpack.c.l.b16 %v195
    %v848 = vunpack.c.h.b16 %v195
    %v849 = vunpack.c.l.b16 %v196
    %v850 = vunpack.c.h.b16 %v196
    %v851 = vunpack.c.l.b16 %v197
    %v852 = vunpack.c.l.b16 %v198
    %v853 = vunpack.c.h.b16 %v198
    %v854 = vunpack.c.l.b16 %v199
    %v855 = vunpack.c.h.b16 %v199
    %v856 = vunpack.c.l.b16 %v200
    %v857 = vunpack.c.l.b16 %v201
    %v858 = vunpack.c.h.b16 %v201
    %v859 = vunpack.c.l.b16 %v202
    %v860 = vunpack.c.h.b16 %v202
    %v861 = vunpack.c.l.b16 %v203
    %v862 = vunpack.c.l.b16 %v204
    %v863 = vunpack.c.h.b16 %v204
    %v864 = vunpack.c.l.b16 %v205
    %v865 = vunpack.c.h.b16 %v205
    %v866 = vunpack.c.l.b16 %v206
    %v867 = vunpack.c.l.b16 %v207
    %v868 = vunpack.c.h.b16 %v207
    %v869 = vunpack.c.l.b16 %v208
    %v870 = vunpack.c.h.b16 %v208
    %v871 = vunpack.c.l.b16 %v209
    %v872 = vunpack.c.l.b16 %v210
    %v873 = vunpack.c.h.b16 %v210
    %v874 = vunpack.c.l.b16 %v211
    %v875 = vunpack.c.h.b16 %v211
    %v876 = vunpack.c.l.b16 %v212
    %v877 = vunpack.c.l.b16 %v213
    %v878 = vunpack.c.h.b16 %v213
    %v879 = vunpack.c.l.b16 %v214
    %v880 = vunpack.c.h.b16 %v214
    %v881 = vunpack.c.l.b16 %v215
    %v882 = vunpack.c.l.b16 %v216
    %v883 = vunpack.c.h.b16 %v216
    %v884 = vunpack.c.l.b16 %v217
    %v885 = vunpack.c.h.b16 %v217
    %v886 = vunpack.c.l.b16 %v218
    %v887 = vunpack.c.l.b16 %v219
    %v888 = vunpack.c.h.b16 %v219
    %v889 = vunpack.c.l.b16 %v220
    %v890 = vunpack.c.h.b16 %v220
    %v891 = vunpack.c.l.b16 %v221
    %v892 = vunpack.c.l.b16 %v222
    %v893 = vunpack.c.h.b16 %v222
    %v894 = vunpack.c.l.b16 %v223
    %v895 = vunpack.c.h.b16 %v223
    %v896 = vunpack.c.l.b16 %v224
    %v897 = vunpack.c.l.b16 %v225
    %v898 = vunpack.c.h.b16 %v225
    %v899 = vunpack.c.l.b16 %v226
    %v900 = vunpack.c.h.b16 %v226
    %v901 = vunpack.c.l.b16 %v227
    %v902 = vunpack.c.l.b16 %v228
    %v903 = vunpack.c.h.b16 %v228
    %v904 = vunpack.c.l.b16 %v229
    %v905 = vunpack.c.h.b16 %v229
    %v906 = vunpack.c.l.b16 %v230
    %v907 = vunpack.c.l.b16 %v231
    %v908 = vunpack.c.h.b16 %v231
    %v909 = vunpack.c.l.b16 %v232
    %v910 = vunpack.c.h.b16 %v232
    %v911 = vunpack.c.l.b16 %v233
    %v912 = vunpack.c.l.b16 %v234
    %v913 = vunpack.c.h.b16 %v234
    %v914 = vunpack.c.l.b16 %v235
    %v915 = vunpack.c.h.b16 %v235
    %v916 = vunpack.c.l.b16 %v236
    %v917 = vunpack.c.l.b16 %v237
    %v918 = vunpack.c.h.b16 %v237
    %v919 = vunpack.c.l.b16 %v238
    %v920 = vunpack.c.h.b16 %v238
    %v921 = vunpack.c.l.b16 %v239
    %v922 = vunpack.c.l.b16 %v240
    %v923 = vunpack.c.h.b16 %v240
    %v924 = vunpack.c.l.b16 %v241
    %v925 = vunpack.c.h.b16 %v241
    %v926 = vunpack.c.l.b16 %v242
    %v927 = vunpack.c.l.b16 %v243
    %v928 = vunpack.c.h.b16 %v243
    %v929 = vunpack.c.l.b16 %v244
    %v930 = vunpack.c.h.b16 %v244
    %v931 = vunpack.c.l.b16 %v245
    %v932 = vunpack.c.l.b16 %v246
    %v933 = vunpack.c.h.b16 %v246
    %v934 = vunpack.c.l.b16 %v247
    %v935 = vunpack.c.h.b16 %v247
    %v936 = vunpack.c.l.b16 %v248
    %v937 = vunpack.c.l.b16 %v249
    %v938 = vunpack.c.h.b16 %v249
    %v939 = vunpack.c.l.b16 %v250
    %v940 = vunpack.c.h.b16 %v250
    %v941 = vunpack.c.l.b16 %v251
    %v942 = vunpack.c.l.b16 %v252
    %v943 = vunpack.c.h.b16 %v252
    %v944 = vunpack.c.l.b16 %v253
    %v945 = vunpack.c.h.b16 %v253
    %v946 = vunpack.c.l.b16 %v254
    %v947 = vunpack.c.l.b16 %v255
    %v948 = vunpack.c.h.b16 %v255
    %v949 = vunpack.c.l.b16 %v256
    %v950 = vunpack.c.h.b16 %v256
    %v951 = vunpack.c.l.b16 %v257
    %v952 = vunpack.c.l.b16 %v258
    %v953 = vunpack.c.h.b16 %v258
    %v954 = vunpack.c.l.b16 %v259
    %v955 = vunpack.c.h.b16 %v259
    %v956 = vunpack.c.l.b16 %v260
    %v957 = vunpack.c.l.b16 %v261
    %v958 = vunpack.c.h.b16 %v261
    %v959 = vunpack.c.l.b16 %v262
    %v960 = vunpack.c.h.b16 %v262
    %v961 = vunpack.c.l.b16 %v263
    %v962 = vunpack.c.l.b16 %v264
    %v963 = vunpack.c.h.b16 %v264
    %v964 = vunpack.c.l.b16 %v265
    %v965 = vunpack.c.h.b16 %v265
    %v966 = vunpack.c.l.b16 %v266
    %v967 = vunpack.c.l.b16 %v267
    %v968 = vunpack.c.h.b16 %v267
    %v969 = vunpack.c.l.b16 %v268
    %v970 = vunpack.c.h.b16 %v268
    %v971 = vunpack.c.l.b16 %v269
    %v972 = vunpack.c.l.b16 %v270
    %v973 = vunpack.c.h.b16 %v270
    %v974 = vunpack.c.l.b16 %v271
    %v975 = vunpack.c.h.b16 %v271
    %v976 = vunpack.c.l.b16 %v272
    %v977 = vunpack.c.l.b16 %v273
    %v978 = vunpack.c.h.b16 %v273
    %v979 = vunpack.c.l.b16 %v274
    %v980 = vunpack.c.h.b16 %v274
    %v981 = vunpack.c.l.b16 %v275
    %v982 = vunpack.c.l.b16 %v276
    %v983 = vunpack.c.h.b16 %v276
    %v984 = vunpack.c.l.b16 %v277
    %v985 = vunpack.c.h.b16 %v277
    %v986 = vunpack.c.l.b16 %v278
    %v987 = vunpack.c.l.b16 %v279
    %v988 = vunpack.c.h.b16 %v279
    %v989 = vunpack.c.l.b16 %v280
    %v990 = vunpack.c.h.b16 %v280
    %v991 = vunpack.c.l.b16 %v281
    %v992 = vunpack.c.l.b16 %v282
    %v993 = vunpack.c.h.b16 %v282
    %v994 = vunpack.c.l.b16 %v283
    %v995 = vunpack.c.h.b16 %v283
    %v996 = vunpack.c.l.b16 %v284
    %v997 = vunpack.c.l.b16 %v285
    %v998 = vunpack.c.h.b16 %v285
    %v999 = vunpack.c.l.b16 %v286
    %v1000 = vunpack.c.h.b16 %v286
    %v1001 = vunpack.c.l.b16 %v287
    %v1002 = vunpack.c.l.b16 %v288
    %v1003 = vunpack.c.h.b16 %v288
    %v1004 = vunpack.c.l.b16 %v289
    %v1005 = vunpack.c.h.b16 %v289
    %v1006 = vunpack.c.l.b16 %v290
    %v1007 = vunpack.c.l.b16 %v291
    %v1008 = vunpack.c.h.b16 %v291
    %v1009 = vunpack.c.l.b16 %v292
    %v1010 = vunpack.c.h.b16 %v292
    %v1011 = vunpack.c.l.b16 %v293
    %v1012 = vunpack.c.l.b16 %v294
    %v1013 = vunpack.c.h.b16 %v294
    %v1014 = vunpack.c.l.b16 %v295
    %v1015 = vunpack.c.h.b16 %v295
    %v1016 = vunpack.c.l.b16 %v296
    %v1017 = vunpack.c.l.b16 %v297
    %v1018 = vunpack.c.h.b16 %v297
    %v1019 = vunpack.c.l.b16 %v298
    %v1020 = vunpack.c.h.b16 %v298
    %v1021 = vunpack.c.l.b16 %v299
    %v1022 = vunpack.c.l.b16 %v300
    %v1023 = vunpack.c.h.b16 %v300
    %v1024 = vunpack.c.l.b16 %v301
    %v1025 = vunpack.c.h.b16 %v301
    %v1026 = vunpack.c.l.b16 %v302
    %v1027 = vunpack.c.l.b16 %v303
    %v1028 = vunpack.c.h.b16 %v303
    %v1029 = vunpack.c.l.b16 %v304
    %v1030 = vunpack.c.h.b16 %v304
    %v1031 = vunpack.c.l.b16 %v305
    %v1032 = vunpack.c.l.b16 %v306
    %v1033 = vunpack.c.h.b16 %v306
    %v1034 = vunpack.c.l.b16 %v307
    %v1035 = vunpack.c.h.b16 %v307
    %v1036 = vunpack.c.l.b16 %v308
    %v1037 = vunpack.c.l.b16 %v309
    %v1038 = vunpack.c.h.b16 %v309
    %v1039 = vunpack.c.l.b16 %v310
    %v1040 = vunpack.c.h.b16 %v310
    %v1041 = vunpack.c.l.b16 %v311
    %v1042 = vunpack.c.l.b16 %v312
    %v1043 = vunpack.c.h.b16 %v312
    %v1044 = vunpack.c.l.b16 %v313
    %v1045 = vunpack.c.h.b16 %v313
    %v1046 = vunpack.c.l.b16 %v314
    %v1047 = vunpack.c.l.b16 %v315
    %v1048 = vunpack.c.h.b16 %v315
    %v1049 = vunpack.c.l.b16 %v316
    %v1050 = vunpack.c.h.b16 %v316
    %v1051 = vunpack.c.l.b16 %v317
    %v1052 = vunpack.c.l.b16 %v318
    %v1053 = vunpack.c.h.b16 %v318
    %v1054 = vunpack.c.l.b16 %v319
    %v1055 = vunpack.c.h.b16 %v319
    %v1056 = vunpack.c.l.b16 %v320
    %v1057 = vunpack.c.l.b16 %v321
    %v1058 = vunpack.c.h.b16 %v321
    %v1059 = vunpack.c.l.b16 %v322
    %v1060 = vunpack.c.h.b16 %v322
    %v1061 = vunpack.c.l.b16 %v323
    %v1062 = vunpack.c.l.b16 %v324
    %v1063 = vunpack.c.h.b16 %v324
    %v1064 = vunpack.c.l.b16 %v325
    %v1065 = vunpack.c.h.b16 %v325
    %v1066 = vunpack.c.l.b16 %v326
    %v1067 = vunpack.c.l.b16 %v327
    %v1068 = vunpack.c.h.b16 %v327
    %v1069 = vunpack.c.l.b16 %v328
    %v1070 = vunpack.c.h.b16 %v328
    %v1071 = vunpack.c.l.b16 %v329
    %v1072 = vunpack.c.l.b16 %v330
    %v1073 = vunpack.c.h.b16 %v330
    %v1074 = vunpack.c.l.b16 %v331
    %v1075 = vunpack.c.h.b16 %v331
    %v1076 = vunpack.c.l.b16 %v332
    %v1077 = vunpack.c.l.b16 %v333
    %v1078 = vunpack.c.h.b16 %v333
    %v1079 = vunpack.c.l.b16 %v334
    %v1080 = vunpack.c.h.b16 %v334
    %v1081 = vunpack.c.l.b16 %v335
    %v1082 = vunpack.c.l.b16 %v336
    %v1083 = vunpack.c.h.b16 %v336
    %v1084 = vunpack.c.l.b16 %v337
    %v1085 = vunpack.c.h.b16 %v337
    %v1086 = vunpack.c.l.b16 %v338
    %v1087 = vunpack.c.l.b16 %v339
    %v1088 = vunpack.c.h.b16 %v339
    %v1089 = vunpack.c.l.b16 %v340
    %v1090 = vunpack.c.h.b16 %v340
    %v1091 = vunpack.c.l.b16 %v341
    %v1092 = vunpack.c.l.b16 %v342
    %v1093 = vunpack.c.h.b16 %v342
    %v1094 = vunpack.c.l.b16 %v343
    %v1095 = vunpack.c.h.b16 %v343
    %v1096 = vunpack.c.l.b16 %v344
    %v1097 = vunpack.c.l.b16 %v345
    %v1098 = vunpack.c.h.b16 %v345
    %v1099 = vunpack.c.l.b16 %v346
    %v1100 = vunpack.c.h.b16 %v346
    %v1101 = vunpack.c.l.b16 %v347
    %v1102 = vunpack.c.l.b16 %v348
    %v1103 = vunpack.c.h.b16 %v348
    %v1104 = vunpack.c.l.b16 %v349
    %v1105 = vunpack.c.h.b16 %v349
    %v1106 = vunpack.c.l.b16 %v350
    %v1107 = vunpack.c.l.b16 %v351
    %v1108 = vunpack.c.h.b16 %v351
    %v1109 = vunpack.c.l.b16 %v352
    %v1110 = vunpack.c.h.b16 %v352
    %v1111 = vunpack.c.l.b16 %v353
    %v1112 = vunpack.c.l.b16 %v354
    %v1113 = vunpack.c.h.b16 %v354
    %v1114 = vunpack.c.l.b16 %v355
    %v1115 = vunpack.c.h.b16 %v355
    %v1116 = vunpack.c.l.b16 %v356
    %v1117 = vunpack.c.l.b16 %v357
    %v1118 = vunpack.c.h.b16 %v357
    %v1119 = vunpack.c.l.b16 %v358
    %v1120 = vunpack.c.h.b16 %v358
    %v1121 = vunpack.c.l.b16 %v359
    %v1122 = vunpack.c.l.b16 %v360
    %v1123 = vunpack.c.h.b16 %v360
    %v1124 = vunpack.c.l.b16 %v361
    %v1125 = vunpack.c.h.b16 %v361
    %v1126 = vunpack.c.l.b16 %v362
    %v1127 = vunpack.c.l.b16 %v363
    %v1128 = vunpack.c.h.b16 %v363
    %v1129 = vunpack.c.l.b16 %v364
    %v1130 = vunpack.c.h.b16 %v364
    %v1131 = vunpack.c.l.b16 %v365
    %v1132 = vunpack.c.l.b16 %v366
    %v1133 = vunpack.c.h.b16 %v366
    %v1134 = vunpack.c.l.b16 %v367
    %v1135 = vunpack.c.h.b16 %v367
    %v1136 = vunpack.c.l.b16 %v368
    %v1137 = vunpack.c.l.b16 %v369
    %v1138 = vunpack.c.h.b16 %v369
    %v1139 = vunpack.c.l.b16 %v370
    %v1140 = vunpack.c.h.b16 %v370
    %v1141 = vunpack.c.l.b16 %v371
    %v1142 = vunpack.c.l.b16 %v372
    %v1143 = vunpack.c.h.b16 %v372
    %v1144 = vunpack.c.l.b16 %v373
    %v1145 = vunpack.c.h.b16 %v373
    %v1146 = vunpack.c.l.b16 %v374
    %v1147 = vunpack.c.l.b16 %v375
    %v1148 = vunpack.c.h.b16 %v375
    %v1149 = vunpack.c.l.b16 %v376
    %v1150 = vunpack.c.h.b16 %v376
    %v1151 = vunpack.c.l.b16 %v377
    %v1152 = vunpack.c.l.b16 %v378
    %v1153 = vunpack.c.h.b16 %v378
    %v1154 = vunpack.c.l.b16 %v379
    %v1155 = vunpack.c.h.b16 %v379
    %v1156 = vunpack.c.l.b16 %v380
    %v1157 = vunpack.c.l.b16 %v381
    %v1158 = vunpack.c.h.b16 %v381
    %v1159 = vunpack.c.l.b16 %v382
    %v1160 = vunpack.c.h.b16 %v382
    %v1161 = vunpack.c.l.b16 %v383
    %v1162 = vunpack.c.l.b16 %v384
    %v1163 = vunpack.c.h.b16 %v384
    %v1164 = vunpack.c.l.b16 %v385
    %v1165 = vunpack.c.h.b16 %v385
    %v1166 = vunpack.c.l.b16 %v386
    %v1167 = vunpack.c.l.b16 %v387
    %v1168 = vunpack.c.h.b16 %v387
    %v1169 = vunpack.c.l.b16 %v388
    %v1170 = vunpack.c.h.b16 %v388
    %v1171 = vunpack.c.l.b16 %v389
    %v1172 = vunpack.c.l.b16 %v390
    %v1173 = vunpack.c.h.b16 %v390
    %v1174 = vunpack.c.l.b16 %v391
    %v1175 = vunpack.c.h.b16 %v391
    %v1176 = vunpack.c.l.b16 %v392
    %v1177 = vunpack.c.l.b16 %v393
    %v1178 = vunpack.c.h.b16 %v393
    %v1179 = vunpack.c.l.b16 %v394
    %v1180 = vunpack.c.h.b16 %v394
    %v1181 = vunpack.c.l.b16 %v395
    %v1182 = vunpack.c.l.b16 %v396
    %v1183 = vunpack.c.h.b16 %v396
    %v1184 = vunpack.c.l.b16 %v397
    %v1185 = vunpack.c.h.b16 %v397
    %v1186 = vunpack.c.l.b16 %v398
    %v1187 = vunpack.c.l.b16 %v399
    %v1188 = vunpack.c.h.b16 %v399
    %v1189 = vunpack.c.l.b16 %v400
    %v1190 = vunpack.c.h.b16 %v400
    %v1191 = vunpack.c.l.b16 %v401
    %v1192 = vunpack.c.l.b16 %v402
    %v1193 = vunpack.c.h.b16 %v402
    %v1194 = vunpack.c.l.b16 %v403
    %v1195 = vunpack.c.h.b16 %v403
    %v1196 = vunpack.c.l.b16 %v404
    %v1197 = vunpack.c.l.b16 %v405
    %v1198 = vunpack.c.h.b16 %v405
    %v1199 = vunpack.c.l.b16 %v406
    %v1200 = vunpack.c.h.b16 %v406
    %v1201 = vunpack.c.l.b16 %v407
    %v1202 = vunpack.c.l.b16 %v408
    %v1203 = vunpack.c.h.b16 %v408
    %v1204 = vunpack.c.l.b16 %v409
    %v1205 = vunpack.c.h.b16 %v409
    %v1206 = vunpack.c.l.b16 %v410
    %v1207 = vpack.c.b16 %v722, %v717
    %v1208 = vpack.c.b16 %v723, %v718
    %v1209 = vpack.c.b16 %v724, %v719
    %v1210 = vpack.c.b16 %v725, %v720
    %v1211 = vpack.c.b16 %v726, %v721
    %v1212 = vpack.c.b16 %v732, %v727
    %v1213 = vpack.c.b16 %v733, %v728
    %v1214 = vpack.c.b16 %v734, %v729
    %v1215 = vpack.c.b16 %v735, %v730
    %v1216 = vpack.c.b16 %v736, %v731
    %v1217 = vpack.c.b16 %v742, %v737
    %v1218 = vpack.c.b16 %v743, %v738
    %v1219 = vpack.c.b16 %v744, %v739
    %v1220 = vpack.c.b16 %v745, %v740
    %v1221 = vpack.c.b16 %v746, %v741
    %v1222 = vpack.c.b16 %v752, %v747
    %v1223 = vpack.c.b16 %v753, %v748
    %v1224 = vpack.c.b16 %v754, %v749
    %v1225 = vpack.c.b16 %v755, %v750
    %v1226 = vpack.c.b16 %v756, %v751
    %v1227 = vpack.c.b16 %v762, %v757
    %v1228 = vpack.c.b16 %v763, %v758
    %v1229 = vpack.c.b16 %v764, %v759
    %v1230 = vpack.c.b16 %v765, %v760
    %v1231 = vpack.c.b16 %v766, %v761
    %v1232 = vpack.c.b16 %v772, %v767
    %v1233 = vpack.c.b16 %v773, %v768
    %v1234 = vpack.c.b16 %v774, %v769
    %v1235 = vpack.c.b16 %v775, %v770
    %v1236 = vpack.c.b16 %v776, %v771
    %v1237 = vpack.c.b16 %v782, %v777
    %v1238 = vpack.c.b16 %v783, %v778
    %v1239 = vpack.c.b16 %v784, %v779
    %v1240 = vpack.c.b16 %v785, %v780
    %v1241 = vpack.c.b16 %v786, %v781
    %v1242 = vpack.c.b16 %v792, %v787
    %v1243 = vpack.c.b16 %v793, %v788
    %v1244 = vpack.c.b16 %v794, %v789
    %v1245 = vpack.c.b16 %v795, %v790
    %v1246 = vpack.c.b16 %v796, %v791
    %v1247 = vpack.c.b16 %v802, %v797
    %v1248 = vpack.c.b16 %v803, %v798
    %v1249 = vpack.c.b16 %v804, %v799
    %v1250 = vpack.c.b16 %v805, %v800
    %v1251 = vpack.c.b16 %v806, %v801
    %v1252 = vpack.c.b16 %v812, %v807
    %v1253 = vpack.c.b16 %v813, %v808
    %v1254 = vpack.c.b16 %v814, %v809
    %v1255 = vpack.c.b16 %v815, %v810
    %v1256 = vpack.c.b16 %v816, %v811
    %v1257 = vpack.c.b16 %v822, %v817
    %v1258 = vpack.c.b16 %v823, %v818
    %v1259 = vpack.c.b16 %v824, %v819
    %v1260 = vpack.c.b16 %v825, %v820
    %v1261 = vpack.c.b16 %v826, %v821
    %v1262 = vpack.c.b16 %v832, %v827
    %v1263 = vpack.c.b16 %v833, %v828
    %v1264 = vpack.c.b16 %v834, %v829
    %v1265 = vpack.c.b16 %v835, %v830
    %v1266 = vpack.c.b16 %v836, %v831
    %v1267 = vpack.c.b16 %v842, %v837
    %v1268 = vpack.c.b16 %v843, %v838
    %v1269 = vpack.c.b16 %v844, %v839
    %v1270 = vpack.c.b16 %v845, %v840
    %v1271 = vpack.c.b16 %v846, %v841
    %v1272 = vpack.c.b16 %v852, %v847
    %v1273 = vpack.c.b16 %v853, %v848
    %v1274 = vpack.c.b16 %v854, %v849
    %v1275 = vpack.c.b16 %v855, %v850
    %v1276 = vpack.c.b16 %v856, %v851
    %v1277 = vpack.c.b16 %v862, %v857
    %v1278 = vpack.c.b16 %v863, %v858
    %v1279 = vpack.c.b16 %v864, %v859
    %v1280 = vpack.c.b16 %v865, %v860
    %v1281 = vpack.c.b16 %v866, %v861
    %v1282 = vpack.c.b16 %v872, %v867
    %v1283 = vpack.c.b16 %v873, %v868
    %v1284 = vpack.c.b16 %v874, %v869
    %v1285 = vpack.c.b16 %v875, %v870
    %v1286 = vpack.c.b16 %v876, %v871
    %v1287 = vpack.c.b16 %v882, %v877
    %v1288 = vpack.c.b16 %v883, %v878
    %v1289 = vpack.c.b16 %v884, %v879
    %v1290 = vpack.c.b16 %v885, %v880
    %v1291 = vpack.c.b16 %v886, %v881
    %v1292 = vpack.c.b16 %v892, %v887
    %v1293 = vpack.c.b16 %v893, %v888
    %v1294 = vpack.c.b16 %v894, %v889
    %v1295 = vpack.c.b16 %v895, %v890
    %v1296 = vpack.c.b16 %v896, %v891
    %v1297 = vpack.c.b16 %v902, %v897
    %v1298 = vpack.c.b16 %v903, %v898
    %v1299 = vpack.c.b16 %v904, %v899
    %v1300 = vpack.c.b16 %v905, %v900
    %v1301 = vpack.c.b16 %v906, %v901
    %v1302 = vpack.c.b16 %v912, %v907
    %v1303 = vpack.c.b16 %v913, %v908
    %v1304 = vpack.c.b16 %v914, %v909
    %v1305 = vpack.c.b16 %v915, %v910
    %v1306 = vpack.c.b16 %v916, %v911
    %v1307 = vpack.c.b16 %v922, %v917
    %v1308 = vpack.c.b16 %v923, %v918
    %v1309 = vpack.c.b16 %v924, %v919
    %v1310 = vpack.c.b16 %v925, %v920
    %v1311 = vpack.c.b16 %v926, %v921
    %v1312 = vpack.c.b16 %v932, %v927
    %v1313 = vpack.c.b16 %v933, %v928
    %v1314 = vpack.c.b16 %v934, %v929
    %v1315 = vpack.c.b16 %v935, %v930
    %v1316 = vpack.c.b16 %v936, %v931
    %v1317 = vpack.c.b16 %v942, %v937
    %v1318 = vpack.c.b16 %v943, %v938
    %v1319 = vpack.c.b16 %v944, %v939
    %v1320 = vpack.c.b16 %v945, %v940
    %v1321 = vpack.c.b16 %v946, %v941
    %v1322 = vpack.c.b16 %v952, %v947
    %v1323 = vpack.c.b16 %v953, %v948
    %v1324 = vpack.c.b16 %v954, %v949
    %v1325 = vpack.c.b16 %v955, %v950
    %v1326 = vpack.c.b16 %v956, %v951
    %v1327 = vpack.c.b16 %v962, %v957
    %v1328 = vpack.c.b16 %v963, %v958
    %v1329 = vpack.c.b16 %v964, %v959
    %v1330 = vpack.c.b16 %v965, %v960
    %v1331 = vpack.c.b16 %v966, %v961
    %v1332 = vpack.c.b16 %v972, %v967
    %v1333 = vpack.c.b16 %v973, %v968
    %v1334 = vpack.c.b16 %v974, %v969
    %v1335 = vpack.c.b16 %v975, %v970
    %v1336 = vpack.c.b16 %v976, %v971
    %v1337 = vpack.c.b16 %v982, %v977
    %v1338 = vpack.c.b16 %v983, %v978
    %v1339 = vpack.c.b16 %v984, %v979
    %v1340 = vpack.c.b16 %v985, %v980
    %v1341 = vpack.c.b16 %v986, %v981
    %v1342 = vpack.c.b16 %v992, %v987
    %v1343 = vpack.c.b16 %v993, %v988
    %v1344 = vpack.c.b16 %v994, %v989
    %v1345 = vpack.c.b16 %v995, %v990
    %v1346 = vpack.c.b16 %v996, %v991
    %v1347 = vpack.c.b16 %v1002, %v997
    %v1348 = vpack.c.b16 %v1003, %v998
    %v1349 = vpack.c.b16 %v1004, %v999
    %v1350 = vpack.c.b16 %v1005, %v1000
    %v1351 = vpack.c.b16 %v1006, %v1001
    %v1352 = vpack.c.b16 %v1012, %v1007
    %v1353 = vpack.c.b16 %v1013, %v1008
    %v1354 = vpack.c.b16 %v1014, %v1009
    %v1355 = vpack.c.b16 %v1015, %v1010
    %v1356 = vpack.c.b16 %v1016, %v1011
    %v1357 = vpack.c.b16 %v1022, %v1017
    %v1358 = vpack.c.b16 %v1023, %v1018
    %v1359 = vpack.c.b16 %v1024, %v1019
    %v1360 = vpack.c.b16 %v1025, %v1020
    %v1361 = vpack.c.b16 %v1026, %v1021
    %v1362 = vpack.c.b16 %v1032, %v1027
    %v1363 = vpack.c.b16 %v1033, %v1028
    %v1364 = vpack.c.b16 %v1034, %v1029
    %v1365 = vpack.c.b16 %v1035, %v1030
    %v1366 = vpack.c.b16 %v1036, %v1031
    %v1367 = vpack.c.b16 %v1042, %v1037
    %v1368 = vpack.c.b16 %v1043, %v1038
    %v1369 = vpack.c.b16 %v1044, %v1039
    %v1370 = vpack.c.b16 %v1045, %v1040
    %v1371 = vpack.c.b16 %v1046, %v1041
    %v1372 = vpack.c.b16 %v1052, %v1047
    %v1373 = vpack.c.b16 %v1053, %v1048
    %v1374 = vpack.c.b16 %v1054, %v1049
    %v1375 = vpack.c.b16 %v1055, %v1050
    %v1376 = vpack.c.b16 %v1056, %v1051
    %v1377 = vpack.c.b16 %v1062, %v1057
    %v1378 = vpack.c.b16 %v1063, %v1058
    %v1379 = vpack.c.b16 %v1064, %v1059
    %v1380 = vpack.c.b16 %v1065, %v1060
    %v1381 = vpack.c.b16 %v1066, %v1061
    %v1382 = vpack.c.b16 %v1072, %v1067
    %v1383 = vpack.c.b16 %v1073, %v1068
    %v1384 = vpack.c.b16 %v1074, %v1069
    %v1385 = vpack.c.b16 %v1075, %v1070
    %v1386 = vpack.c.b16 %v1076, %v1071
    %v1387 = vpack.c.b16 %v1082, %v1077
    %v1388 = vpack.c.b16 %v1083, %v1078
    %v1389 = vpack.c.b16 %v1084, %v1079
    %v1390 = vpack.c.b16 %v1085, %v1080
    %v1391 = vpack.c.b16 %v1086, %v1081
    %v1392 = vpack.c.b16 %v1092, %v1087
    %v1393 = vpack.c.b16 %v1093, %v1088
    %v1394 = vpack.c.b16 %v1094, %v1089
    %v1395 = vpack.c.b16 %v1095, %v1090
    %v1396 = vpack.c.b16 %v1096, %v1091
    %v1397 = vpack.c.b16 %v1102, %v1097
    %v1398 = vpack.c.b16 %v1103, %v1098
    %v1399 = vpack.c.b16 %v1104, %v1099
    %v1400 = vpack.c.b16 %v1105, %v1100
    %v1401 = vpack.c.b16 %v1106, %v1101
    %v1402 = vpack.c.b16 %v1112, %v1107
    %v1403 = vpack.c.b16 %v1113, %v1108
    %v1404 = vpack.c.b16 %v1114, %v1109
    %v1405 = vpack.c.b16 %v1115, %v1110
    %v1406 = vpack.c.b16 %v1116, %v1111
    %v1407 = vpack.c.b16 %v1122, %v1117
    %v1408 = vpack.c.b16 %v1123, %v1118
    %v1409 = vpack.c.b16 %v1124, %v1119
    %v1410 = vpack.c.b16 %v1125, %v1120
    %v1411 = vpack.c.b16 %v1126, %v1121
    %v1412 = vpack.c.b16 %v1132, %v1127
    %v1413 = vpack.c.b16 %v1133, %v1128
    %v1414 = vpack.c.b16 %v1134, %v1129
    %v1415 = vpack.c.b16 %v1135, %v1130
    %v1416 = vpack.c.b16 %v1136, %v1131
    %v1417 = vpack.c.b16 %v1142, %v1137
    %v1418 = vpack.c.b16 %v1143, %v1138
    %v1419 = vpack.c.b16 %v1144, %v1139
    %v1420 = vpack.c.b16 %v1145, %v1140
    %v1421 = vpack.c.b16 %v1146, %v1141
    %v1422 = vpack.c.b16 %v1152, %v1147
    %v1423 = vpack.c.b16 %v1153, %v1148
    %v1424 = vpack.c.b16 %v1154, %v1149
    %v1425 = vpack.c.b16 %v1155, %v1150
    %v1426 = vpack.c.b16 %v1156, %v1151
    %v1427 = vpack.c.b16 %v1162, %v1157
    %v1428 = vpack.c.b16 %v1163, %v1158
    %v1429 = vpack.c.b16 %v1164, %v1159
    %v1430 = vpack.c.b16 %v1165, %v1160
    %v1431 = vpack.c.b16 %v1166, %v1161
    %v1432 = vpack.c.b16 %v1172, %v1167
    %v1433 = vpack.c.b16 %v1173, %v1168
    %v1434 = vpack.c.b16 %v1174, %v1169
    %v1435 = vpack.c.b16 %v1175, %v1170
    %v1436 = vpack.c.b16 %v1176, %v1171
    %v1437 = vpack.c.b16 %v1182, %v1177
    %v1438 = vpack.c.b16 %v1183, %v1178
    %v1439 = vpack.c.b16 %v1184, %v1179
    %v1440 = vpack.c.b16 %v1185, %v1180
    %v1441 = vpack.c.b16 %v1186, %v1181
    %v1442 = vpack.c.b16 %v1192, %v1187
    %v1443 = vpack.c.b16 %v1193, %v1188
    %v1444 = vpack.c.b16 %v1194, %v1189
    %v1445 = vpack.c.b16 %v1195, %v1190
    %v1446 = vpack.c.b16 %v1196, %v1191
    %v1447 = vpack.c.b16 %v1202, %v1197
    %v1448 = vpack.c.b16 %v1203, %v1198
    %v1449 = vpack.c.b16 %v1204, %v1199
    %v1450 = vpack.c.b16 %v1205, %v1200
    %v1451 = vpack.c.b16 %v1206, %v1201
    %vm1697 = vcmask 130048
    %v1699 = vsel %vm1697, %v116, 0
    %1701 = vmatpush.bf16.msra.mxu0 %v1242
    %1702 = vmatpush.bf16.msra.mxu0 %v1237
    %1703 = vmatpush.bf16.msra.mxu0 %v1232
    %1704 = vmatpush.bf16.msra.mxu0 %v1227
    %1705 = vmatpush.bf16.msra.mxu0 %v1222
    %1706 = vmatpush.bf16.msra.mxu0 %v1217
    %1707 = vmatpush.bf16.msra.mxu0 %v1212
    %1708 = vmatpush.bf16.msra.mxu0 %v1207
    %1709 = vmatmul.bf16.gmra.mxu0 %v110
    %v1710 = vpop.f32.mrf.mxu0
    %v1711 = vadd.f32 %v413, %v1710
    %v1712 = vpop.f32.mrf.mxu0
    %1713 = vdwg.mxu0
    %1714 = vmatpush.bf16.msra.mxu0 %v1282
    %1715 = vmatpush.bf16.msra.mxu0 %v1277
    %1716 = vmatpush.bf16.msra.mxu0 %v1272
    %1717 = vmatpush.bf16.msra.mxu0 %v1267
    %1718 = vmatpush.bf16.msra.mxu0 %v1262
    %1719 = vmatpush.bf16.msra.mxu0 %v1257
    %1720 = vmatpush.bf16.msra.mxu0 %v1252
    %1721 = vmatpush.bf16.msra.mxu0 %v1247
    %1722 = vmatmul.bf16.gmra.mxu0 %v111
    %v1723 = vpop.f32.mrf.mxu0
    %v1724 = vadd.f32 %v1711, %v1723
    %v1725 = vpop.f32.mrf.mxu0
    %1726 = vdwg.mxu0
    %1727 = vmatpush.bf16.msra.mxu0 %v1322
    %1728 = vmatpush.bf16.msra.mxu0 %v1317
    %1729 = vmatpush.bf16.msra.mxu0 %v1312
    %1730 = vmatpush.bf16.msra.mxu0 %v1307
    %1731 = vmatpush.bf16.msra.mxu0 %v1302
    %1732 = vmatpush.bf16.msra.mxu0 %v1297
    %1733 = vmatpush.bf16.msra.mxu0 %v1292
    %1734 = vmatpush.bf16.msra.mxu0 %v1287
    %1735 = vmatmul.bf16.gmra.mxu0 %v112
    %v1736 = vpop.f32.mrf.mxu0
    %v1737 = vadd.f32 %v1724, %v1736
    %v1738 = vpop.f32.mrf.mxu0
    %1739 = vdwg.mxu0
    %1740 = vmatpush.bf16.msra.mxu0 %v1362
    %1741 = vmatpush.bf16.msra.mxu0 %v1357
    %1742 = vmatpush.bf16.msra.mxu0 %v1352
    %1743 = vmatpush.bf16.msra.mxu0 %v1347
    %1744 = vmatpush.bf16.msra.mxu0 %v1342
    %1745 = vmatpush.bf16.msra.mxu0 %v1337
    %1746 = vmatpush.bf16.msra.mxu0 %v1332
    %1747 = vmatpush.bf16.msra.mxu0 %v1327
    %1748 = vmatmul.bf16.gmra.mxu0 %v113
    %v1749 = vpop.f32.mrf.mxu0
    %v1750 = vadd.f32 %v1737, %v1749
    %v1751 = vpop.f32.mrf.mxu0
    %1752 = vdwg.mxu0
    %1753 = vmatpush.bf16.msra.mxu0 %v1402
    %1754 = vmatpush.bf16.msra.mxu0 %v1397
    %1755 = vmatpush.bf16.msra.mxu0 %v1392
    %1756 = vmatpush.bf16.msra.mxu0 %v1387
    %1757 = vmatpush.bf16.msra.mxu0 %v1382
    %1758 = vmatpush.bf16.msra.mxu0 %v1377
    %1759 = vmatpush.bf16.msra.mxu0 %v1372
    %1760 = vmatpush.bf16.msra.mxu0 %v1367
    %1761 = vmatmul.bf16.gmra.mxu0 %v114
    %v1762 = vpop.f32.mrf.mxu0
    %v1763 = vadd.f32 %v1750, %v1762
    %v1764 = vpop.f32.mrf.mxu0
    %1765 = vdwg.mxu0
    %1766 = vmatpush.bf16.msra.mxu0 %v1442
    %1767 = vmatpush.bf16.msra.mxu0 %v1437
    %1768 = vmatpush.bf16.msra.mxu0 %v1432
    %1769 = vmatpush.bf16.msra.mxu0 %v1427
    %1770 = vmatpush.bf16.msra.mxu0 %v1422
    %1771 = vmatpush.bf16.msra.mxu0 %v1417
    %1772 = vmatpush.bf16.msra.mxu0 %v1412
    %1773 = vmatpush.bf16.msra.mxu0 %v1407
    %1774 = vmatmul.bf16.gmra.mxu0 %v115
    %v1775 = vpop.f32.mrf.mxu0
    %v1776 = vadd.f32 %v1763, %v1775
    %v1777 = vpop.f32.mrf.mxu0
    %1778 = vdwg.mxu0
    %1779 = vmatpush.bf16.msra.mxu0 0
    %1780 = vmatpush.bf16.msra.mxu0 0
    %1781 = vmatpush.bf16.msra.mxu0 0
    %1782 = vmatpush.bf16.msra.mxu0 0
    %1783 = vmatpush.bf16.msra.mxu0 0
    %1784 = vmatpush.bf16.msra.mxu0 0
    %1785 = vmatpush.bf16.msra.mxu0 0
    %1786 = vmatpush.bf16.msra.mxu0 %v1447
    %1787 = vmatmul.bf16.gmra.mxu0 %v1699
    %v1788 = vpop.f32.mrf.mxu0
    %v1789 = vadd.f32 %v1776, %v1788
    %v1790 = vpop.f32.mrf.mxu0
    %1791 = vdwg.mxu0
    %1792 = vmatpush.bf16.msra.mxu0 %v1243
    %1793 = vmatpush.bf16.msra.mxu0 %v1238
    %1794 = vmatpush.bf16.msra.mxu0 %v1233
    %1795 = vmatpush.bf16.msra.mxu0 %v1228
    %1796 = vmatpush.bf16.msra.mxu0 %v1223
    %1797 = vmatpush.bf16.msra.mxu0 %v1218
    %1798 = vmatpush.bf16.msra.mxu0 %v1213
    %1799 = vmatpush.bf16.msra.mxu0 %v1208
    %1800 = vmatmul.bf16.gmra.mxu0 %v110
    %v1801 = vpop.f32.mrf.mxu0
    %v1802 = vadd.f32 %v414, %v1801
    %v1803 = vpop.f32.mrf.mxu0
    %1804 = vdwg.mxu0
    %1805 = vmatpush.bf16.msra.mxu0 %v1283
    %1806 = vmatpush.bf16.msra.mxu0 %v1278
    %1807 = vmatpush.bf16.msra.mxu0 %v1273
    %1808 = vmatpush.bf16.msra.mxu0 %v1268
    %1809 = vmatpush.bf16.msra.mxu0 %v1263
    %1810 = vmatpush.bf16.msra.mxu0 %v1258
    %1811 = vmatpush.bf16.msra.mxu0 %v1253
    %1812 = vmatpush.bf16.msra.mxu0 %v1248
    %1813 = vmatmul.bf16.gmra.mxu0 %v111
    %v1814 = vpop.f32.mrf.mxu0
    %v1815 = vadd.f32 %v1802, %v1814
    %v1816 = vpop.f32.mrf.mxu0
    %1817 = vdwg.mxu0
    %1818 = vmatpush.bf16.msra.mxu0 %v1323
    %1819 = vmatpush.bf16.msra.mxu0 %v1318
    %1820 = vmatpush.bf16.msra.mxu0 %v1313
    %1821 = vmatpush.bf16.msra.mxu0 %v1308
    %1822 = vmatpush.bf16.msra.mxu0 %v1303
    %1823 = vmatpush.bf16.msra.mxu0 %v1298
    %1824 = vmatpush.bf16.msra.mxu0 %v1293
    %1825 = vmatpush.bf16.msra.mxu0 %v1288
    %1826 = vmatmul.bf16.gmra.mxu0 %v112
    %v1827 = vpop.f32.mrf.mxu0
    %v1828 = vadd.f32 %v1815, %v1827
    %v1829 = vpop.f32.mrf.mxu0
    %1830 = vdwg.mxu0
    %1831 = vmatpush.bf16.msra.mxu0 %v1363
    %1832 = vmatpush.bf16.msra.mxu0 %v1358
    %1833 = vmatpush.bf16.msra.mxu0 %v1353
    %1834 = vmatpush.bf16.msra.mxu0 %v1348
    %1835 = vmatpush.bf16.msra.mxu0 %v1343
    %1836 = vmatpush.bf16.msra.mxu0 %v1338
    %1837 = vmatpush.bf16.msra.mxu0 %v1333
    %1838 = vmatpush.bf16.msra.mxu0 %v1328
    %1839 = vmatmul.bf16.gmra.mxu0 %v113
    %v1840 = vpop.f32.mrf.mxu0
    %v1841 = vadd.f32 %v1828, %v1840
    %v1842 = vpop.f32.mrf.mxu0
    %1843 = vdwg.mxu0
    %1844 = vmatpush.bf16.msra.mxu0 %v1403
    %1845 = vmatpush.bf16.msra.mxu0 %v1398
    %1846 = vmatpush.bf16.msra.mxu0 %v1393
    %1847 = vmatpush.bf16.msra.mxu0 %v1388
    %1848 = vmatpush.bf16.msra.mxu0 %v1383
    %1849 = vmatpush.bf16.msra.mxu0 %v1378
    %1850 = vmatpush.bf16.msra.mxu0 %v1373
    %1851 = vmatpush.bf16.msra.mxu0 %v1368
    %1852 = vmatmul.bf16.gmra.mxu0 %v114
    %v1853 = vpop.f32.mrf.mxu0
    %v1854 = vadd.f32 %v1841, %v1853
    %v1855 = vpop.f32.mrf.mxu0
    %1856 = vdwg.mxu0
    %1857 = vmatpush.bf16.msra.mxu0 %v1443
    %1858 = vmatpush.bf16.msra.mxu0 %v1438
    %1859 = vmatpush.bf16.msra.mxu0 %v1433
    %1860 = vmatpush.bf16.msra.mxu0 %v1428
    %1861 = vmatpush.bf16.msra.mxu0 %v1423
    %1862 = vmatpush.bf16.msra.mxu0 %v1418
    %1863 = vmatpush.bf16.msra.mxu0 %v1413
    %1864 = vmatpush.bf16.msra.mxu0 %v1408
    %1865 = vmatmul.bf16.gmra.mxu0 %v115
    %v1866 = vpop.f32.mrf.mxu0
    %v1867 = vadd.f32 %v1854, %v1866
    %v1868 = vpop.f32.mrf.mxu0
    %1869 = vdwg.mxu0
    %1870 = vmatpush.bf16.msra.mxu0 0
    %1871 = vmatpush.bf16.msra.mxu0 0
    %1872 = vmatpush.bf16.msra.mxu0 0
    %1873 = vmatpush.bf16.msra.mxu0 0
    %1874 = vmatpush.bf16.msra.mxu0 0
    %1875 = vmatpush.bf16.msra.mxu0 0
    %1876 = vmatpush.bf16.msra.mxu0 0
    %1877 = vmatpush.bf16.msra.mxu0 %v1448
    %1878 = vmatmul.bf16.gmra.mxu0 %v1699
    %v1879 = vpop.f32.mrf.mxu0
    %v1880 = vadd.f32 %v1867, %v1879
    %v1881 = vpop.f32.mrf.mxu0
    %1882 = vdwg.mxu0
    %1883 = vmatpush.bf16.msra.mxu0 %v1244
    %1884 = vmatpush.bf16.msra.mxu0 %v1239
    %1885 = vmatpush.bf16.msra.mxu0 %v1234
    %1886 = vmatpush.bf16.msra.mxu0 %v1229
    %1887 = vmatpush.bf16.msra.mxu0 %v1224
    %1888 = vmatpush.bf16.msra.mxu0 %v1219
    %1889 = vmatpush.bf16.msra.mxu0 %v1214
    %1890 = vmatpush.bf16.msra.mxu0 %v1209
    %1891 = vmatmul.bf16.gmra.mxu0 %v110
    %v1892 = vpop.f32.mrf.mxu0
    %v1893 = vadd.f32 %v415, %v1892
    %v1894 = vpop.f32.mrf.mxu0
    %1895 = vdwg.mxu0
    %1896 = vmatpush.bf16.msra.mxu0 %v1284
    %1897 = vmatpush.bf16.msra.mxu0 %v1279
    %1898 = vmatpush.bf16.msra.mxu0 %v1274
    %1899 = vmatpush.bf16.msra.mxu0 %v1269
    %1900 = vmatpush.bf16.msra.mxu0 %v1264
    %1901 = vmatpush.bf16.msra.mxu0 %v1259
    %1902 = vmatpush.bf16.msra.mxu0 %v1254
    %1903 = vmatpush.bf16.msra.mxu0 %v1249
    %1904 = vmatmul.bf16.gmra.mxu0 %v111
    %v1905 = vpop.f32.mrf.mxu0
    %v1906 = vadd.f32 %v1893, %v1905
    %v1907 = vpop.f32.mrf.mxu0
    %1908 = vdwg.mxu0
    %1909 = vmatpush.bf16.msra.mxu0 %v1324
    %1910 = vmatpush.bf16.msra.mxu0 %v1319
    %1911 = vmatpush.bf16.msra.mxu0 %v1314
    %1912 = vmatpush.bf16.msra.mxu0 %v1309
    %1913 = vmatpush.bf16.msra.mxu0 %v1304
    %1914 = vmatpush.bf16.msra.mxu0 %v1299
    %1915 = vmatpush.bf16.msra.mxu0 %v1294
    %1916 = vmatpush.bf16.msra.mxu0 %v1289
    %1917 = vmatmul.bf16.gmra.mxu0 %v112
    %v1918 = vpop.f32.mrf.mxu0
    %v1919 = vadd.f32 %v1906, %v1918
    %v1920 = vpop.f32.mrf.mxu0
    %1921 = vdwg.mxu0
    %1922 = vmatpush.bf16.msra.mxu0 %v1364
    %1923 = vmatpush.bf16.msra.mxu0 %v1359
    %1924 = vmatpush.bf16.msra.mxu0 %v1354
    %1925 = vmatpush.bf16.msra.mxu0 %v1349
    %1926 = vmatpush.bf16.msra.mxu0 %v1344
    %1927 = vmatpush.bf16.msra.mxu0 %v1339
    %1928 = vmatpush.bf16.msra.mxu0 %v1334
    %1929 = vmatpush.bf16.msra.mxu0 %v1329
    %1930 = vmatmul.bf16.gmra.mxu0 %v113
    %v1931 = vpop.f32.mrf.mxu0
    %v1932 = vadd.f32 %v1919, %v1931
    %v1933 = vpop.f32.mrf.mxu0
    %1934 = vdwg.mxu0
    %1935 = vmatpush.bf16.msra.mxu0 %v1404
    %1936 = vmatpush.bf16.msra.mxu0 %v1399
    %1937 = vmatpush.bf16.msra.mxu0 %v1394
    %1938 = vmatpush.bf16.msra.mxu0 %v1389
    %1939 = vmatpush.bf16.msra.mxu0 %v1384
    %1940 = vmatpush.bf16.msra.mxu0 %v1379
    %1941 = vmatpush.bf16.msra.mxu0 %v1374
    %1942 = vmatpush.bf16.msra.mxu0 %v1369
    %1943 = vmatmul.bf16.gmra.mxu0 %v114
    %v1944 = vpop.f32.mrf.mxu0
    %v1945 = vadd.f32 %v1932, %v1944
    %v1946 = vpop.f32.mrf.mxu0
    %1947 = vdwg.mxu0
    %1948 = vmatpush.bf16.msra.mxu0 %v1444
    %1949 = vmatpush.bf16.msra.mxu0 %v1439
    %1950 = vmatpush.bf16.msra.mxu0 %v1434
    %1951 = vmatpush.bf16.msra.mxu0 %v1429
    %1952 = vmatpush.bf16.msra.mxu0 %v1424
    %1953 = vmatpush.bf16.msra.mxu0 %v1419
    %1954 = vmatpush.bf16.msra.mxu0 %v1414
    %1955 = vmatpush.bf16.msra.mxu0 %v1409
    %1956 = vmatmul.bf16.gmra.mxu0 %v115
    %v1957 = vpop.f32.mrf.mxu0
    %v1958 = vadd.f32 %v1945, %v1957
    %v1959 = vpop.f32.mrf.mxu0
    %1960 = vdwg.mxu0
    %1961 = vmatpush.bf16.msra.mxu0 0
    %1962 = vmatpush.bf16.msra.mxu0 0
    %1963 = vmatpush.bf16.msra.mxu0 0
    %1964 = vmatpush.bf16.msra.mxu0 0
    %1965 = vmatpush.bf16.msra.mxu0 0
    %1966 = vmatpush.bf16.msra.mxu0 0
    %1967 = vmatpush.bf16.msra.mxu0 0
    %1968 = vmatpush.bf16.msra.mxu0 %v1449
    %1969 = vmatmul.bf16.gmra.mxu0 %v1699
    %v1970 = vpop.f32.mrf.mxu0
    %v1971 = vadd.f32 %v1958, %v1970
    %v1972 = vpop.f32.mrf.mxu0
    %1973 = vdwg.mxu0
    %1974 = vmatpush.bf16.msra.mxu0 %v1245
    %1975 = vmatpush.bf16.msra.mxu0 %v1240
    %1976 = vmatpush.bf16.msra.mxu0 %v1235
    %1977 = vmatpush.bf16.msra.mxu0 %v1230
    %1978 = vmatpush.bf16.msra.mxu0 %v1225
    %1979 = vmatpush.bf16.msra.mxu0 %v1220
    %1980 = vmatpush.bf16.msra.mxu0 %v1215
    %1981 = vmatpush.bf16.msra.mxu0 %v1210
    %1982 = vmatmul.bf16.gmra.mxu0 %v110
    %v1983 = vpop.f32.mrf.mxu0
    %v1984 = vadd.f32 %v416, %v1983
    %v1985 = vpop.f32.mrf.mxu0
    %1986 = vdwg.mxu0
    %1987 = vmatpush.bf16.msra.mxu0 %v1285
    %1988 = vmatpush.bf16.msra.mxu0 %v1280
    %1989 = vmatpush.bf16.msra.mxu0 %v1275
    %1990 = vmatpush.bf16.msra.mxu0 %v1270
    %1991 = vmatpush.bf16.msra.mxu0 %v1265
    %1992 = vmatpush.bf16.msra.mxu0 %v1260
    %1993 = vmatpush.bf16.msra.mxu0 %v1255
    %1994 = vmatpush.bf16.msra.mxu0 %v1250
    %1995 = vmatmul.bf16.gmra.mxu0 %v111
    %v1996 = vpop.f32.mrf.mxu0
    %v1997 = vadd.f32 %v1984, %v1996
    %v1998 = vpop.f32.mrf.mxu0
    %1999 = vdwg.mxu0
    %2000 = vmatpush.bf16.msra.mxu0 %v1325
    %2001 = vmatpush.bf16.msra.mxu0 %v1320
    %2002 = vmatpush.bf16.msra.mxu0 %v1315
    %2003 = vmatpush.bf16.msra.mxu0 %v1310
    %2004 = vmatpush.bf16.msra.mxu0 %v1305
    %2005 = vmatpush.bf16.msra.mxu0 %v1300
    %2006 = vmatpush.bf16.msra.mxu0 %v1295
    %2007 = vmatpush.bf16.msra.mxu0 %v1290
    %2008 = vmatmul.bf16.gmra.mxu0 %v112
    %v2009 = vpop.f32.mrf.mxu0
    %v2010 = vadd.f32 %v1997, %v2009
    %v2011 = vpop.f32.mrf.mxu0
    %2012 = vdwg.mxu0
    %2013 = vmatpush.bf16.msra.mxu0 %v1365
    %2014 = vmatpush.bf16.msra.mxu0 %v1360
    %2015 = vmatpush.bf16.msra.mxu0 %v1355
    %2016 = vmatpush.bf16.msra.mxu0 %v1350
    %2017 = vmatpush.bf16.msra.mxu0 %v1345
    %2018 = vmatpush.bf16.msra.mxu0 %v1340
    %2019 = vmatpush.bf16.msra.mxu0 %v1335
    %2020 = vmatpush.bf16.msra.mxu0 %v1330
    %2021 = vmatmul.bf16.gmra.mxu0 %v113
    %v2022 = vpop.f32.mrf.mxu0
    %v2023 = vadd.f32 %v2010, %v2022
    %v2024 = vpop.f32.mrf.mxu0
    %2025 = vdwg.mxu0
    %2026 = vmatpush.bf16.msra.mxu0 %v1405
    %2027 = vmatpush.bf16.msra.mxu0 %v1400
    %2028 = vmatpush.bf16.msra.mxu0 %v1395
    %2029 = vmatpush.bf16.msra.mxu0 %v1390
    %2030 = vmatpush.bf16.msra.mxu0 %v1385
    %2031 = vmatpush.bf16.msra.mxu0 %v1380
    %2032 = vmatpush.bf16.msra.mxu0 %v1375
    %2033 = vmatpush.bf16.msra.mxu0 %v1370
    %2034 = vmatmul.bf16.gmra.mxu0 %v114
    %v2035 = vpop.f32.mrf.mxu0
    %v2036 = vadd.f32 %v2023, %v2035
    %v2037 = vpop.f32.mrf.mxu0
    %2038 = vdwg.mxu0
    %2039 = vmatpush.bf16.msra.mxu0 %v1445
    %2040 = vmatpush.bf16.msra.mxu0 %v1440
    %2041 = vmatpush.bf16.msra.mxu0 %v1435
    %2042 = vmatpush.bf16.msra.mxu0 %v1430
    %2043 = vmatpush.bf16.msra.mxu0 %v1425
    %2044 = vmatpush.bf16.msra.mxu0 %v1420
    %2045 = vmatpush.bf16.msra.mxu0 %v1415
    %2046 = vmatpush.bf16.msra.mxu0 %v1410
    %2047 = vmatmul.bf16.gmra.mxu0 %v115
    %v2048 = vpop.f32.mrf.mxu0
    %v2049 = vadd.f32 %v2036, %v2048
    %v2050 = vpop.f32.mrf.mxu0
    %2051 = vdwg.mxu0
    %2052 = vmatpush.bf16.msra.mxu0 0
    %2053 = vmatpush.bf16.msra.mxu0 0
    %2054 = vmatpush.bf16.msra.mxu0 0
    %2055 = vmatpush.bf16.msra.mxu0 0
    %2056 = vmatpush.bf16.msra.mxu0 0
    %2057 = vmatpush.bf16.msra.mxu0 0
    %2058 = vmatpush.bf16.msra.mxu0 0
    %2059 = vmatpush.bf16.msra.mxu0 %v1450
    %2060 = vmatmul.bf16.gmra.mxu0 %v1699
    %v2061 = vpop.f32.mrf.mxu0
    %v2062 = vadd.f32 %v2049, %v2061
    %v2063 = vpop.f32.mrf.mxu0
    %2064 = vdwg.mxu0
    %2065 = vmatpush.bf16.msra.mxu0 %v1246
    %2066 = vmatpush.bf16.msra.mxu0 %v1241
    %2067 = vmatpush.bf16.msra.mxu0 %v1236
    %2068 = vmatpush.bf16.msra.mxu0 %v1231
    %2069 = vmatpush.bf16.msra.mxu0 %v1226
    %2070 = vmatpush.bf16.msra.mxu0 %v1221
    %2071 = vmatpush.bf16.msra.mxu0 %v1216
    %2072 = vmatpush.bf16.msra.mxu0 %v1211
    %2073 = vmatmul.bf16.gmra.mxu0 %v110
    %v2074 = vpop.f32.mrf.mxu0
    %v2075 = vadd.f32 %v417, %v2074
    %v2076 = vpop.f32.mrf.mxu0
    %2077 = vdwg.mxu0
    %2078 = vmatpush.bf16.msra.mxu0 %v1286
    %2079 = vmatpush.bf16.msra.mxu0 %v1281
    %2080 = vmatpush.bf16.msra.mxu0 %v1276
    %2081 = vmatpush.bf16.msra.mxu0 %v1271
    %2082 = vmatpush.bf16.msra.mxu0 %v1266
    %2083 = vmatpush.bf16.msra.mxu0 %v1261
    %2084 = vmatpush.bf16.msra.mxu0 %v1256
    %2085 = vmatpush.bf16.msra.mxu0 %v1251
    %2086 = vmatmul.bf16.gmra.mxu0 %v111
    %v2087 = vpop.f32.mrf.mxu0
    %v2088 = vadd.f32 %v2075, %v2087
    %v2089 = vpop.f32.mrf.mxu0
    %2090 = vdwg.mxu0
    %2091 = vmatpush.bf16.msra.mxu0 %v1326
    %2092 = vmatpush.bf16.msra.mxu0 %v1321
    %2093 = vmatpush.bf16.msra.mxu0 %v1316
    %2094 = vmatpush.bf16.msra.mxu0 %v1311
    %2095 = vmatpush.bf16.msra.mxu0 %v1306
    %2096 = vmatpush.bf16.msra.mxu0 %v1301
    %2097 = vmatpush.bf16.msra.mxu0 %v1296
    %2098 = vmatpush.bf16.msra.mxu0 %v1291
    %2099 = vmatmul.bf16.gmra.mxu0 %v112
    %v2100 = vpop.f32.mrf.mxu0
    %v2101 = vadd.f32 %v2088, %v2100
    %v2102 = vpop.f32.mrf.mxu0
    %2103 = vdwg.mxu0
    %2104 = vmatpush.bf16.msra.mxu0 %v1366
    %2105 = vmatpush.bf16.msra.mxu0 %v1361
    %2106 = vmatpush.bf16.msra.mxu0 %v1356
    %2107 = vmatpush.bf16.msra.mxu0 %v1351
    %2108 = vmatpush.bf16.msra.mxu0 %v1346
    %2109 = vmatpush.bf16.msra.mxu0 %v1341
    %2110 = vmatpush.bf16.msra.mxu0 %v1336
    %2111 = vmatpush.bf16.msra.mxu0 %v1331
    %2112 = vmatmul.bf16.gmra.mxu0 %v113
    %v2113 = vpop.f32.mrf.mxu0
    %v2114 = vadd.f32 %v2101, %v2113
    %v2115 = vpop.f32.mrf.mxu0
    %2116 = vdwg.mxu0
    %2117 = vmatpush.bf16.msra.mxu0 %v1406
    %2118 = vmatpush.bf16.msra.mxu0 %v1401
    %2119 = vmatpush.bf16.msra.mxu0 %v1396
    %2120 = vmatpush.bf16.msra.mxu0 %v1391
    %2121 = vmatpush.bf16.msra.mxu0 %v1386
    %2122 = vmatpush.bf16.msra.mxu0 %v1381
    %2123 = vmatpush.bf16.msra.mxu0 %v1376
    %2124 = vmatpush.bf16.msra.mxu0 %v1371
    %2125 = vmatmul.bf16.gmra.mxu0 %v114
    %v2126 = vpop.f32.mrf.mxu0
    %v2127 = vadd.f32 %v2114, %v2126
    %v2128 = vpop.f32.mrf.mxu0
    %2129 = vdwg.mxu0
    %2130 = vmatpush.bf16.msra.mxu0 %v1446
    %2131 = vmatpush.bf16.msra.mxu0 %v1441
    %2132 = vmatpush.bf16.msra.mxu0 %v1436
    %2133 = vmatpush.bf16.msra.mxu0 %v1431
    %2134 = vmatpush.bf16.msra.mxu0 %v1426
    %2135 = vmatpush.bf16.msra.mxu0 %v1421
    %2136 = vmatpush.bf16.msra.mxu0 %v1416
    %2137 = vmatpush.bf16.msra.mxu0 %v1411
    %2138 = vmatmul.bf16.gmra.mxu0 %v115
    %v2139 = vpop.f32.mrf.mxu0
    %v2140 = vadd.f32 %v2127, %v2139
    %v2141 = vpop.f32.mrf.mxu0
    %2142 = vdwg.mxu0
    %2143 = vmatpush.bf16.msra.mxu0 0
    %2144 = vmatpush.bf16.msra.mxu0 0
    %2145 = vmatpush.bf16.msra.mxu0 0
    %2146 = vmatpush.bf16.msra.mxu0 0
    %2147 = vmatpush.bf16.msra.mxu0 0
    %2148 = vmatpush.bf16.msra.mxu0 0
    %2149 = vmatpush.bf16.msra.mxu0 0
    %2150 = vmatpush.bf16.msra.mxu0 %v1451
    %2151 = vmatmul.bf16.gmra.mxu0 %v1699
    %v2152 = vpop.f32.mrf.mxu0
    %v2153 = vadd.f32 %v2140, %v2152
    %v2154 = vpop.f32.mrf.mxu0
    %2155 = vdwg.mxu0
    %v2156 = vmax.f32 %v1789, 0.0
    %v2157 = vmax.f32 %v1880, 0.0
    %v2158 = vmax.f32 %v1971, 0.0
    %v2159 = vmax.f32 %v2062, 0.0
    %v2160 = vmax.f32 %v2153, 0.0
    %v2161 = vpack.c.bf16 %v2156, %v2156
    %v2162 = vpack.c.bf16 %v2157, %v2157
    %v2163 = vpack.c.bf16 %v2158, %v2158
    %v2164 = vpack.c.bf16 %v2159, %v2159
    %v2165 = vpack.c.bf16 %v2160, %v2160
    %v2166 = vld [vmem:[%s2] sm:$0xff]
    %v2167 = vld [vmem:[%s2 + $0x8] sm:$0xf]
    %v2168 = vld [vmem:[%s2 + $0xc] sm:$0xff]
    %v2169 = vld [vmem:[%s2 + $0x14] sm:$0xf]
    %v2170 = vld [vmem:[%s2 + $0x18] sm:$0xff]
    %v2171 = vld [vmem:[%s2 + $0x20] sm:$0xf]
    %v2172 = vld [vmem:[%s2 + $0x24] sm:$0xff]
    %v2173 = vld [vmem:[%s2 + $0x2c] sm:$0xf]
    %v2174 = vld [vmem:[%s2 + $0x30] sm:$0xff]
    %v2175 = vld [vmem:[%s2 + $0x38] sm:$0xf]
    %v2176 = vld [vmem:[%s2 + $0x3c] sm:$0xff]
    %v2177 = vld [vmem:[%s2 + $0x44] sm:$0xf]
    %v2178 = vld [vmem:[%s2 + $0x48] sm:$0xff]
    %v2179 = vld [vmem:[%s2 + $0x50] sm:$0xf]
    %v2180 = vld [vmem:[%s2 + $0x54] sm:$0xff]
    %v2181 = vld [vmem:[%s2 + $0x5c] sm:$0xf]
    %v2182 = vld [vmem:[%s2 + $0x60] sm:$0xff]
    %v2183 = vld [vmem:[%s2 + $0x68] sm:$0xf]
    %v2184 = vld [vmem:[%s2 + $0x6c] sm:$0xff]
    %v2185 = vld [vmem:[%s2 + $0x74] sm:$0xf]
    %v2186 = vld [vmem:[%s2 + $0x78] sm:$0xff]
    %v2187 = vld [vmem:[%s2 + $0x80] sm:$0xf]
    %v2188 = vld [vmem:[%s2 + $0x84] sm:$0xff]
    %v2189 = vld [vmem:[%s2 + $0x8c] sm:$0xf]
    %v2190 = vld [vmem:[%s2 + $0x90] sm:$0xff]
    %v2191 = vld [vmem:[%s2 + $0x98] sm:$0xf]
    %v2192 = vld [vmem:[%s2 + $0x9c] sm:$0xff]
    %v2193 = vld [vmem:[%s2 + $0xa4] sm:$0xf]
    %v2194 = vld [vmem:[%s2 + $0xa8] sm:$0xff]
    %v2195 = vld [vmem:[%s2 + $0xb0] sm:$0xf]
    %v2196 = vld [vmem:[%s2 + $0xb4] sm:$0xff]
    %v2197 = vld [vmem:[%s2 + $0xbc] sm:$0xf]
    %v2198 = vld [vmem:[%s2 + $0xc0] sm:$0xff]
    %v2199 = vld [vmem:[%s2 + $0xc8] sm:$0xf]
    %v2200 = vld [vmem:[%s2 + $0xcc] sm:$0xff]
    %v2201 = vld [vmem:[%s2 + $0xd4] sm:$0xf]
    %v2202 = vld [vmem:[%s2 + $0xd8] sm:$0xff]
    %v2203 = vld [vmem:[%s2 + $0xe0] sm:$0xf]
    %v2204 = vld [vmem:[%s2 + $0xe4] sm:$0xff]
    %v2205 = vld [vmem:[%s2 + $0xec] sm:$0xf]
    %v2206 = vld [vmem:[%s2 + $0xf0] sm:$0xff]
    %v2207 = vld [vmem:[%s2 + $0xf8] sm:$0xf]
    %v2208 = vld [vmem:[%s2 + $0xfc] sm:$0xff]
    %v2209 = vld [vmem:[%s2 + $0x104] sm:$0xf]
    %v2210 = vld [vmem:[%s2 + $0x108] sm:$0xff]
    %v2211 = vld [vmem:[%s2 + $0x110] sm:$0xf]
    %v2212 = vld [vmem:[%s2 + $0x114] sm:$0xff]
    %v2213 = vld [vmem:[%s2 + $0x11c] sm:$0xf]
    %v2214 = vld [vmem:[%s2 + $0x120] sm:$0xff]
    %v2215 = vld [vmem:[%s2 + $0x128] sm:$0xf]
    %v2216 = vld [vmem:[%s2 + $0x12c] sm:$0xff]
    %v2217 = vld [vmem:[%s2 + $0x134] sm:$0xf]
    %v2218 = vld [vmem:[%s2 + $0x138] sm:$0xff]
    %v2219 = vld [vmem:[%s2 + $0x140] sm:$0xf]
    %v2220 = vld [vmem:[%s2 + $0x144] sm:$0xff]
    %v2221 = vld [vmem:[%s2 + $0x14c] sm:$0xf]
    %v2222 = vld [vmem:[%s2 + $0x150] sm:$0xff]
    %v2223 = vld [vmem:[%s2 + $0x158] sm:$0xf]
    %v2224 = vld [vmem:[%s2 + $0x15c] sm:$0xff]
    %v2225 = vld [vmem:[%s2 + $0x164] sm:$0xf]
    %v2226 = vld [vmem:[%s2 + $0x168] sm:$0xff]
    %v2227 = vld [vmem:[%s2 + $0x170] sm:$0xf]
    %v2228 = vld [vmem:[%s2 + $0x174] sm:$0xff]
    %v2229 = vld [vmem:[%s2 + $0x17c] sm:$0xf]
    %v2230 = vld [vmem:[%s2 + $0x180] sm:$0xff]
    %v2231 = vld [vmem:[%s2 + $0x188] sm:$0xf]
    %v2232 = vld [vmem:[%s2 + $0x18c] sm:$0xff]
    %v2233 = vld [vmem:[%s2 + $0x194] sm:$0xf]
    %v2234 = vld [vmem:[%s2 + $0x198] sm:$0xff]
    %v2235 = vld [vmem:[%s2 + $0x1a0] sm:$0xf]
    %v2236 = vld [vmem:[%s2 + $0x1a4] sm:$0xff]
    %v2237 = vld [vmem:[%s2 + $0x1ac] sm:$0xf]
    %v2238 = vld [vmem:[%s2 + $0x1b0] sm:$0xff]
    %v2239 = vld [vmem:[%s2 + $0x1b8] sm:$0xf]
    %v2240 = vld [vmem:[%s2 + $0x1bc] sm:$0xff]
    %v2241 = vld [vmem:[%s2 + $0x1c4] sm:$0xf]
    %v2242 = vld [vmem:[%s2 + $0x1c8] sm:$0xff]
    %v2243 = vld [vmem:[%s2 + $0x1d0] sm:$0xf]
    %v2244 = vld [vmem:[%s2 + $0x1d4] sm:$0xff]
    %v2245 = vld [vmem:[%s2 + $0x1dc] sm:$0xf]
    %v2246 = vld [vmem:[%s2 + $0x1e0] sm:$0xff]
    %v2247 = vld [vmem:[%s2 + $0x1e8] sm:$0xf]
    %v2248 = vld [vmem:[%s2 + $0x1ec] sm:$0xff]
    %v2249 = vld [vmem:[%s2 + $0x1f4] sm:$0xf]
    %v2250 = vld [vmem:[%s2 + $0x1f8] sm:$0xff]
    %v2251 = vld [vmem:[%s2 + $0x200] sm:$0xf]
    %v2252 = vld [vmem:[%s2 + $0x204] sm:$0xff]
    %v2253 = vld [vmem:[%s2 + $0x20c] sm:$0xf]
    %v2254 = vld [vmem:[%s2 + $0x210] sm:$0xff]
    %v2255 = vld [vmem:[%s2 + $0x218] sm:$0xf]
    %v2256 = vld [vmem:[%s2 + $0x21c] sm:$0xff]
    %v2257 = vld [vmem:[%s2 + $0x224] sm:$0xf]
    %v2258 = vld [vmem:[%s2 + $0x228] sm:$0xff]
    %v2259 = vld [vmem:[%s2 + $0x230] sm:$0xf]
    %v2260 = vld [vmem:[%s2 + $0x234] sm:$0xff]
    %v2261 = vld [vmem:[%s2 + $0x23c] sm:$0xf]
    %v2262 = vld [vmem:[%s2 + $0x240] sm:$0xff]
    %v2263 = vld [vmem:[%s2 + $0x248] sm:$0xf]
    %v2264 = vld [vmem:[%s2 + $0x24c] sm:$0xff]
    %v2265 = vld [vmem:[%s2 + $0x254] sm:$0xf]
    %v2266 = vld [vmem:[%s2 + $0x258] sm:$0xff]
    %v2267 = vld [vmem:[%s2 + $0x260] sm:$0xf]
    %v2268 = vld [vmem:[%s2 + $0x264] sm:$0xff]
    %v2269 = vld [vmem:[%s2 + $0x26c] sm:$0xf]
    %v2270 = vld [vmem:[%s2 + $0x270] sm:$0xff]
    %v2271 = vld [vmem:[%s2 + $0x278] sm:$0xf]
    %v2272 = vld [vmem:[%s2 + $0x27c] sm:$0xff]
    %v2273 = vld [vmem:[%s2 + $0x284] sm:$0xf]
    %v2274 = vld [vmem:[%s2 + $0x288] sm:$0xff]
    %v2275 = vld [vmem:[%s2 + $0x290] sm:$0xf]
    %v2276 = vld [vmem:[%s2 + $0x294] sm:$0xff]
    %v2277 = vld [vmem:[%s2 + $0x29c] sm:$0xf]
    %v2278 = vld [vmem:[%s2 + $0x2a0] sm:$0xff]
    %v2279 = vld [vmem:[%s2 + $0x2a8] sm:$0xf]
    %v2280 = vld [vmem:[%s2 + $0x2ac] sm:$0xff]
    %v2281 = vld [vmem:[%s2 + $0x2b4] sm:$0xf]
    %v2282 = vld [vmem:[%s2 + $0x2b8] sm:$0xff]
    %v2283 = vld [vmem:[%s2 + $0x2c0] sm:$0xf]
    %v2284 = vld [vmem:[%s2 + $0x2c4] sm:$0xff]
    %v2285 = vld [vmem:[%s2 + $0x2cc] sm:$0xf]
    %v2286 = vld [vmem:[%s2 + $0x2d0] sm:$0xff]
    %v2287 = vld [vmem:[%s2 + $0x2d8] sm:$0xf]
    %v2288 = vld [vmem:[%s2 + $0x2dc] sm:$0xff]
    %v2289 = vld [vmem:[%s2 + $0x2e4] sm:$0xf]
    %v2290 = vld [vmem:[%s2 + $0x2e8] sm:$0xff]
    %v2291 = vld [vmem:[%s2 + $0x2f0] sm:$0xf]
    %v2292 = vld [vmem:[%s2 + $0x2f4] sm:$0xff]
    %v2293 = vld [vmem:[%s2 + $0x2fc] sm:$0xf]
    %v2294 = vld [vmem:[%s2 + $0x300] sm:$0xff]
    %v2295 = vld [vmem:[%s2 + $0x308] sm:$0xf]
    %v2296 = vld [vmem:[%s7] sm:$0x7]
    %v2298 = vperm.slane %v2296, 0
    %v2299 = vperm.slane %v2296, 1
    %v2300 = vperm.slane %v2296, 2
    %v2434 = vunpack.c.l.b16 %v2166
    %v2435 = vunpack.c.h.b16 %v2166
    %v2436 = vunpack.c.l.b16 %v2167
    %v2437 = vunpack.c.l.b16 %v2168
    %v2438 = vunpack.c.h.b16 %v2168
    %v2439 = vunpack.c.l.b16 %v2169
    %v2440 = vunpack.c.l.b16 %v2170
    %v2441 = vunpack.c.h.b16 %v2170
    %v2442 = vunpack.c.l.b16 %v2171
    %v2443 = vunpack.c.l.b16 %v2172
    %v2444 = vunpack.c.h.b16 %v2172
    %v2445 = vunpack.c.l.b16 %v2173
    %v2446 = vunpack.c.l.b16 %v2174
    %v2447 = vunpack.c.h.b16 %v2174
    %v2448 = vunpack.c.l.b16 %v2175
    %v2449 = vunpack.c.l.b16 %v2176
    %v2450 = vunpack.c.h.b16 %v2176
    %v2451 = vunpack.c.l.b16 %v2177
    %v2452 = vunpack.c.l.b16 %v2178
    %v2453 = vunpack.c.h.b16 %v2178
    %v2454 = vunpack.c.l.b16 %v2179
    %v2455 = vunpack.c.l.b16 %v2180
    %v2456 = vunpack.c.h.b16 %v2180
    %v2457 = vunpack.c.l.b16 %v2181
    %v2458 = vunpack.c.l.b16 %v2182
    %v2459 = vunpack.c.h.b16 %v2182
    %v2460 = vunpack.c.l.b16 %v2183
    %v2461 = vunpack.c.l.b16 %v2184
    %v2462 = vunpack.c.h.b16 %v2184
    %v2463 = vunpack.c.l.b16 %v2185
    %v2464 = vunpack.c.l.b16 %v2186
    %v2465 = vunpack.c.h.b16 %v2186
    %v2466 = vunpack.c.l.b16 %v2187
    %v2467 = vunpack.c.l.b16 %v2188
    %v2468 = vunpack.c.h.b16 %v2188
    %v2469 = vunpack.c.l.b16 %v2189
    %v2470 = vunpack.c.l.b16 %v2190
    %v2471 = vunpack.c.h.b16 %v2190
    %v2472 = vunpack.c.l.b16 %v2191
    %v2473 = vunpack.c.l.b16 %v2192
    %v2474 = vunpack.c.h.b16 %v2192
    %v2475 = vunpack.c.l.b16 %v2193
    %v2476 = vunpack.c.l.b16 %v2194
    %v2477 = vunpack.c.h.b16 %v2194
    %v2478 = vunpack.c.l.b16 %v2195
    %v2479 = vunpack.c.l.b16 %v2196
    %v2480 = vunpack.c.h.b16 %v2196
    %v2481 = vunpack.c.l.b16 %v2197
    %v2482 = vunpack.c.l.b16 %v2198
    %v2483 = vunpack.c.h.b16 %v2198
    %v2484 = vunpack.c.l.b16 %v2199
    %v2485 = vunpack.c.l.b16 %v2200
    %v2486 = vunpack.c.h.b16 %v2200
    %v2487 = vunpack.c.l.b16 %v2201
    %v2488 = vunpack.c.l.b16 %v2202
    %v2489 = vunpack.c.h.b16 %v2202
    %v2490 = vunpack.c.l.b16 %v2203
    %v2491 = vunpack.c.l.b16 %v2204
    %v2492 = vunpack.c.h.b16 %v2204
    %v2493 = vunpack.c.l.b16 %v2205
    %v2494 = vunpack.c.l.b16 %v2206
    %v2495 = vunpack.c.h.b16 %v2206
    %v2496 = vunpack.c.l.b16 %v2207
    %v2497 = vunpack.c.l.b16 %v2208
    %v2498 = vunpack.c.h.b16 %v2208
    %v2499 = vunpack.c.l.b16 %v2209
    %v2500 = vunpack.c.l.b16 %v2210
    %v2501 = vunpack.c.h.b16 %v2210
    %v2502 = vunpack.c.l.b16 %v2211
    %v2503 = vunpack.c.l.b16 %v2212
    %v2504 = vunpack.c.h.b16 %v2212
    %v2505 = vunpack.c.l.b16 %v2213
    %v2506 = vunpack.c.l.b16 %v2214
    %v2507 = vunpack.c.h.b16 %v2214
    %v2508 = vunpack.c.l.b16 %v2215
    %v2509 = vunpack.c.l.b16 %v2216
    %v2510 = vunpack.c.h.b16 %v2216
    %v2511 = vunpack.c.l.b16 %v2217
    %v2512 = vunpack.c.l.b16 %v2218
    %v2513 = vunpack.c.h.b16 %v2218
    %v2514 = vunpack.c.l.b16 %v2219
    %v2515 = vunpack.c.l.b16 %v2220
    %v2516 = vunpack.c.h.b16 %v2220
    %v2517 = vunpack.c.l.b16 %v2221
    %v2518 = vunpack.c.l.b16 %v2222
    %v2519 = vunpack.c.h.b16 %v2222
    %v2520 = vunpack.c.l.b16 %v2223
    %v2521 = vunpack.c.l.b16 %v2224
    %v2522 = vunpack.c.h.b16 %v2224
    %v2523 = vunpack.c.l.b16 %v2225
    %v2524 = vunpack.c.l.b16 %v2226
    %v2525 = vunpack.c.h.b16 %v2226
    %v2526 = vunpack.c.l.b16 %v2227
    %v2527 = vunpack.c.l.b16 %v2228
    %v2528 = vunpack.c.h.b16 %v2228
    %v2529 = vunpack.c.l.b16 %v2229
    %v2530 = vunpack.c.l.b16 %v2230
    %v2531 = vunpack.c.h.b16 %v2230
    %v2532 = vunpack.c.l.b16 %v2231
    %v2533 = vunpack.c.l.b16 %v2232
    %v2534 = vunpack.c.h.b16 %v2232
    %v2535 = vunpack.c.l.b16 %v2233
    %v2536 = vunpack.c.l.b16 %v2234
    %v2537 = vunpack.c.h.b16 %v2234
    %v2538 = vunpack.c.l.b16 %v2235
    %v2539 = vunpack.c.l.b16 %v2236
    %v2540 = vunpack.c.h.b16 %v2236
    %v2541 = vunpack.c.l.b16 %v2237
    %v2542 = vunpack.c.l.b16 %v2238
    %v2543 = vunpack.c.h.b16 %v2238
    %v2544 = vunpack.c.l.b16 %v2239
    %v2545 = vunpack.c.l.b16 %v2240
    %v2546 = vunpack.c.h.b16 %v2240
    %v2547 = vunpack.c.l.b16 %v2241
    %v2548 = vunpack.c.l.b16 %v2242
    %v2549 = vunpack.c.h.b16 %v2242
    %v2550 = vunpack.c.l.b16 %v2243
    %v2551 = vunpack.c.l.b16 %v2244
    %v2552 = vunpack.c.h.b16 %v2244
    %v2553 = vunpack.c.l.b16 %v2245
    %v2554 = vunpack.c.l.b16 %v2246
    %v2555 = vunpack.c.h.b16 %v2246
    %v2556 = vunpack.c.l.b16 %v2247
    %v2557 = vunpack.c.l.b16 %v2248
    %v2558 = vunpack.c.h.b16 %v2248
    %v2559 = vunpack.c.l.b16 %v2249
    %v2560 = vunpack.c.l.b16 %v2250
    %v2561 = vunpack.c.h.b16 %v2250
    %v2562 = vunpack.c.l.b16 %v2251
    %v2563 = vunpack.c.l.b16 %v2252
    %v2564 = vunpack.c.h.b16 %v2252
    %v2565 = vunpack.c.l.b16 %v2253
    %v2566 = vunpack.c.l.b16 %v2254
    %v2567 = vunpack.c.h.b16 %v2254
    %v2568 = vunpack.c.l.b16 %v2255
    %v2569 = vunpack.c.l.b16 %v2256
    %v2570 = vunpack.c.h.b16 %v2256
    %v2571 = vunpack.c.l.b16 %v2257
    %v2572 = vunpack.c.l.b16 %v2258
    %v2573 = vunpack.c.h.b16 %v2258
    %v2574 = vunpack.c.l.b16 %v2259
    %v2575 = vunpack.c.l.b16 %v2260
    %v2576 = vunpack.c.h.b16 %v2260
    %v2577 = vunpack.c.l.b16 %v2261
    %v2578 = vunpack.c.l.b16 %v2262
    %v2579 = vunpack.c.h.b16 %v2262
    %v2580 = vunpack.c.l.b16 %v2263
    %v2581 = vunpack.c.l.b16 %v2264
    %v2582 = vunpack.c.h.b16 %v2264
    %v2583 = vunpack.c.l.b16 %v2265
    %v2584 = vunpack.c.l.b16 %v2266
    %v2585 = vunpack.c.h.b16 %v2266
    %v2586 = vunpack.c.l.b16 %v2267
    %v2587 = vunpack.c.l.b16 %v2268
    %v2588 = vunpack.c.h.b16 %v2268
    %v2589 = vunpack.c.l.b16 %v2269
    %v2590 = vunpack.c.l.b16 %v2270
    %v2591 = vunpack.c.h.b16 %v2270
    %v2592 = vunpack.c.l.b16 %v2271
    %v2593 = vunpack.c.l.b16 %v2272
    %v2594 = vunpack.c.h.b16 %v2272
    %v2595 = vunpack.c.l.b16 %v2273
    %v2596 = vunpack.c.l.b16 %v2274
    %v2597 = vunpack.c.h.b16 %v2274
    %v2598 = vunpack.c.l.b16 %v2275
    %v2599 = vunpack.c.l.b16 %v2276
    %v2600 = vunpack.c.h.b16 %v2276
    %v2601 = vunpack.c.l.b16 %v2277
    %v2602 = vunpack.c.l.b16 %v2278
    %v2603 = vunpack.c.h.b16 %v2278
    %v2604 = vunpack.c.l.b16 %v2279
    %v2605 = vunpack.c.l.b16 %v2280
    %v2606 = vunpack.c.h.b16 %v2280
    %v2607 = vunpack.c.l.b16 %v2281
    %v2608 = vunpack.c.l.b16 %v2282
    %v2609 = vunpack.c.h.b16 %v2282
    %v2610 = vunpack.c.l.b16 %v2283
    %v2611 = vunpack.c.l.b16 %v2284
    %v2612 = vunpack.c.h.b16 %v2284
    %v2613 = vunpack.c.l.b16 %v2285
    %v2614 = vunpack.c.l.b16 %v2286
    %v2615 = vunpack.c.h.b16 %v2286
    %v2616 = vunpack.c.l.b16 %v2287
    %v2617 = vunpack.c.l.b16 %v2288
    %v2618 = vunpack.c.h.b16 %v2288
    %v2619 = vunpack.c.l.b16 %v2289
    %v2620 = vunpack.c.l.b16 %v2290
    %v2621 = vunpack.c.h.b16 %v2290
    %v2622 = vunpack.c.l.b16 %v2291
    %v2623 = vunpack.c.l.b16 %v2292
    %v2624 = vunpack.c.h.b16 %v2292
    %v2625 = vunpack.c.l.b16 %v2293
    %v2626 = vunpack.c.l.b16 %v2294
    %v2627 = vunpack.c.h.b16 %v2294
    %v2628 = vunpack.c.l.b16 %v2295
    %v2629 = vpack.c.b16 %v2437, %v2434
    %v2630 = vpack.c.b16 %v2438, %v2435
    %v2631 = vpack.c.b16 %v2439, %v2436
    %v2632 = vpack.c.b16 %v2443, %v2440
    %v2633 = vpack.c.b16 %v2444, %v2441
    %v2634 = vpack.c.b16 %v2445, %v2442
    %v2635 = vpack.c.b16 %v2449, %v2446
    %v2636 = vpack.c.b16 %v2450, %v2447
    %v2637 = vpack.c.b16 %v2451, %v2448
    %v2638 = vpack.c.b16 %v2455, %v2452
    %v2639 = vpack.c.b16 %v2456, %v2453
    %v2640 = vpack.c.b16 %v2457, %v2454
    %v2641 = vpack.c.b16 %v2461, %v2458
    %v2642 = vpack.c.b16 %v2462, %v2459
    %v2643 = vpack.c.b16 %v2463, %v2460
    %v2644 = vpack.c.b16 %v2467, %v2464
    %v2645 = vpack.c.b16 %v2468, %v2465
    %v2646 = vpack.c.b16 %v2469, %v2466
    %v2647 = vpack.c.b16 %v2473, %v2470
    %v2648 = vpack.c.b16 %v2474, %v2471
    %v2649 = vpack.c.b16 %v2475, %v2472
    %v2650 = vpack.c.b16 %v2479, %v2476
    %v2651 = vpack.c.b16 %v2480, %v2477
    %v2652 = vpack.c.b16 %v2481, %v2478
    %v2653 = vpack.c.b16 %v2485, %v2482
    %v2654 = vpack.c.b16 %v2486, %v2483
    %v2655 = vpack.c.b16 %v2487, %v2484
    %v2656 = vpack.c.b16 %v2491, %v2488
    %v2657 = vpack.c.b16 %v2492, %v2489
    %v2658 = vpack.c.b16 %v2493, %v2490
    %v2659 = vpack.c.b16 %v2497, %v2494
    %v2660 = vpack.c.b16 %v2498, %v2495
    %v2661 = vpack.c.b16 %v2499, %v2496
    %v2662 = vpack.c.b16 %v2503, %v2500
    %v2663 = vpack.c.b16 %v2504, %v2501
    %v2664 = vpack.c.b16 %v2505, %v2502
    %v2665 = vpack.c.b16 %v2509, %v2506
    %v2666 = vpack.c.b16 %v2510, %v2507
    %v2667 = vpack.c.b16 %v2511, %v2508
    %v2668 = vpack.c.b16 %v2515, %v2512
    %v2669 = vpack.c.b16 %v2516, %v2513
    %v2670 = vpack.c.b16 %v2517, %v2514
    %v2671 = vpack.c.b16 %v2521, %v2518
    %v2672 = vpack.c.b16 %v2522, %v2519
    %v2673 = vpack.c.b16 %v2523, %v2520
    %v2674 = vpack.c.b16 %v2527, %v2524
    %v2675 = vpack.c.b16 %v2528, %v2525
    %v2676 = vpack.c.b16 %v2529, %v2526
    %v2677 = vpack.c.b16 %v2533, %v2530
    %v2678 = vpack.c.b16 %v2534, %v2531
    %v2679 = vpack.c.b16 %v2535, %v2532
    %v2680 = vpack.c.b16 %v2539, %v2536
    %v2681 = vpack.c.b16 %v2540, %v2537
    %v2682 = vpack.c.b16 %v2541, %v2538
    %v2683 = vpack.c.b16 %v2545, %v2542
    %v2684 = vpack.c.b16 %v2546, %v2543
    %v2685 = vpack.c.b16 %v2547, %v2544
    %v2686 = vpack.c.b16 %v2551, %v2548
    %v2687 = vpack.c.b16 %v2552, %v2549
    %v2688 = vpack.c.b16 %v2553, %v2550
    %v2689 = vpack.c.b16 %v2557, %v2554
    %v2690 = vpack.c.b16 %v2558, %v2555
    %v2691 = vpack.c.b16 %v2559, %v2556
    %v2692 = vpack.c.b16 %v2563, %v2560
    %v2693 = vpack.c.b16 %v2564, %v2561
    %v2694 = vpack.c.b16 %v2565, %v2562
    %v2695 = vpack.c.b16 %v2569, %v2566
    %v2696 = vpack.c.b16 %v2570, %v2567
    %v2697 = vpack.c.b16 %v2571, %v2568
    %v2698 = vpack.c.b16 %v2575, %v2572
    %v2699 = vpack.c.b16 %v2576, %v2573
    %v2700 = vpack.c.b16 %v2577, %v2574
    %v2701 = vpack.c.b16 %v2581, %v2578
    %v2702 = vpack.c.b16 %v2582, %v2579
    %v2703 = vpack.c.b16 %v2583, %v2580
    %v2704 = vpack.c.b16 %v2587, %v2584
    %v2705 = vpack.c.b16 %v2588, %v2585
    %v2706 = vpack.c.b16 %v2589, %v2586
    %v2707 = vpack.c.b16 %v2593, %v2590
    %v2708 = vpack.c.b16 %v2594, %v2591
    %v2709 = vpack.c.b16 %v2595, %v2592
    %v2710 = vpack.c.b16 %v2599, %v2596
    %v2711 = vpack.c.b16 %v2600, %v2597
    %v2712 = vpack.c.b16 %v2601, %v2598
    %v2713 = vpack.c.b16 %v2605, %v2602
    %v2714 = vpack.c.b16 %v2606, %v2603
    %v2715 = vpack.c.b16 %v2607, %v2604
    %v2716 = vpack.c.b16 %v2611, %v2608
    %v2717 = vpack.c.b16 %v2612, %v2609
    %v2718 = vpack.c.b16 %v2613, %v2610
    %v2719 = vpack.c.b16 %v2617, %v2614
    %v2720 = vpack.c.b16 %v2618, %v2615
    %v2721 = vpack.c.b16 %v2619, %v2616
    %v2722 = vpack.c.b16 %v2623, %v2620
    %v2723 = vpack.c.b16 %v2624, %v2621
    %v2724 = vpack.c.b16 %v2625, %v2622
    %v2725 = vpack.c.b16 %v2626, %v2626
    %v2726 = vpack.c.b16 %v2627, %v2627
    %v2727 = vpack.c.b16 %v2628, %v2628
    %vm2824 = vcmask 64512
    %v2826 = vsel %vm2824, %v2165, 0
    %vm2828 = vcmask 1043456
    %v2830 = vsel %vm2828, %v2725, 0
    %v2833 = vsel %vm2828, %v2726, 0
    %v2836 = vsel %vm2828, %v2727, 0
    %2838 = vmatpush.bf16.msra.mxu0 %v2650
    %2839 = vmatpush.bf16.msra.mxu0 %v2647
    %2840 = vmatpush.bf16.msra.mxu0 %v2644
    %2841 = vmatpush.bf16.msra.mxu0 %v2641
    %2842 = vmatpush.bf16.msra.mxu0 %v2638
    %2843 = vmatpush.bf16.msra.mxu0 %v2635
    %2844 = vmatpush.bf16.msra.mxu0 %v2632
    %2845 = vmatpush.bf16.msra.mxu0 %v2629
    %2846 = vmatmul.bf16.gmra.mxu0 %v2161
    %v2847 = vpop.f32.mrf.mxu0
    %v2848 = vadd.f32 %v2298, %v2847
    %v2849 = vpop.f32.mrf.mxu0
    %2850 = vdwg.mxu0
    %2851 = vmatpush.bf16.msra.mxu0 %v2674
    %2852 = vmatpush.bf16.msra.mxu0 %v2671
    %2853 = vmatpush.bf16.msra.mxu0 %v2668
    %2854 = vmatpush.bf16.msra.mxu0 %v2665
    %2855 = vmatpush.bf16.msra.mxu0 %v2662
    %2856 = vmatpush.bf16.msra.mxu0 %v2659
    %2857 = vmatpush.bf16.msra.mxu0 %v2656
    %2858 = vmatpush.bf16.msra.mxu0 %v2653
    %2859 = vmatmul.bf16.gmra.mxu0 %v2162
    %v2860 = vpop.f32.mrf.mxu0
    %v2861 = vadd.f32 %v2848, %v2860
    %v2862 = vpop.f32.mrf.mxu0
    %2863 = vdwg.mxu0
    %2864 = vmatpush.bf16.msra.mxu0 %v2698
    %2865 = vmatpush.bf16.msra.mxu0 %v2695
    %2866 = vmatpush.bf16.msra.mxu0 %v2692
    %2867 = vmatpush.bf16.msra.mxu0 %v2689
    %2868 = vmatpush.bf16.msra.mxu0 %v2686
    %2869 = vmatpush.bf16.msra.mxu0 %v2683
    %2870 = vmatpush.bf16.msra.mxu0 %v2680
    %2871 = vmatpush.bf16.msra.mxu0 %v2677
    %2872 = vmatmul.bf16.gmra.mxu0 %v2163
    %v2873 = vpop.f32.mrf.mxu0
    %v2874 = vadd.f32 %v2861, %v2873
    %v2875 = vpop.f32.mrf.mxu0
    %2876 = vdwg.mxu0
    %2877 = vmatpush.bf16.msra.mxu0 %v2722
    %2878 = vmatpush.bf16.msra.mxu0 %v2719
    %2879 = vmatpush.bf16.msra.mxu0 %v2716
    %2880 = vmatpush.bf16.msra.mxu0 %v2713
    %2881 = vmatpush.bf16.msra.mxu0 %v2710
    %2882 = vmatpush.bf16.msra.mxu0 %v2707
    %2883 = vmatpush.bf16.msra.mxu0 %v2704
    %2884 = vmatpush.bf16.msra.mxu0 %v2701
    %2885 = vmatmul.bf16.gmra.mxu0 %v2164
    %v2886 = vpop.f32.mrf.mxu0
    %v2887 = vadd.f32 %v2874, %v2886
    %v2888 = vpop.f32.mrf.mxu0
    %2889 = vdwg.mxu0
    %2890 = vmatpush.bf16.msra.mxu0 0
    %2891 = vmatpush.bf16.msra.mxu0 0
    %2892 = vmatpush.bf16.msra.mxu0 0
    %2893 = vmatpush.bf16.msra.mxu0 0
    %2894 = vmatpush.bf16.msra.mxu0 0
    %2895 = vmatpush.bf16.msra.mxu0 0
    %2896 = vmatpush.bf16.msra.mxu0 0
    %2897 = vmatpush.bf16.msra.mxu0 %v2830
    %2898 = vmatmul.bf16.gmra.mxu0 %v2826
    %v2899 = vpop.f32.mrf.mxu0
    %v2900 = vadd.f32 %v2887, %v2899
    %v2901 = vpop.f32.mrf.mxu0
    %2902 = vdwg.mxu0
    %2903 = vmatpush.bf16.msra.mxu0 %v2651
    %2904 = vmatpush.bf16.msra.mxu0 %v2648
    %2905 = vmatpush.bf16.msra.mxu0 %v2645
    %2906 = vmatpush.bf16.msra.mxu0 %v2642
    %2907 = vmatpush.bf16.msra.mxu0 %v2639
    %2908 = vmatpush.bf16.msra.mxu0 %v2636
    %2909 = vmatpush.bf16.msra.mxu0 %v2633
    %2910 = vmatpush.bf16.msra.mxu0 %v2630
    %2911 = vmatmul.bf16.gmra.mxu0 %v2161
    %v2912 = vpop.f32.mrf.mxu0
    %v2913 = vadd.f32 %v2299, %v2912
    %v2914 = vpop.f32.mrf.mxu0
    %2915 = vdwg.mxu0
    %2916 = vmatpush.bf16.msra.mxu0 %v2675
    %2917 = vmatpush.bf16.msra.mxu0 %v2672
    %2918 = vmatpush.bf16.msra.mxu0 %v2669
    %2919 = vmatpush.bf16.msra.mxu0 %v2666
    %2920 = vmatpush.bf16.msra.mxu0 %v2663
    %2921 = vmatpush.bf16.msra.mxu0 %v2660
    %2922 = vmatpush.bf16.msra.mxu0 %v2657
    %2923 = vmatpush.bf16.msra.mxu0 %v2654
    %2924 = vmatmul.bf16.gmra.mxu0 %v2162
    %v2925 = vpop.f32.mrf.mxu0
    %v2926 = vadd.f32 %v2913, %v2925
    %v2927 = vpop.f32.mrf.mxu0
    %2928 = vdwg.mxu0
    %2929 = vmatpush.bf16.msra.mxu0 %v2699
    %2930 = vmatpush.bf16.msra.mxu0 %v2696
    %2931 = vmatpush.bf16.msra.mxu0 %v2693
    %2932 = vmatpush.bf16.msra.mxu0 %v2690
    %2933 = vmatpush.bf16.msra.mxu0 %v2687
    %2934 = vmatpush.bf16.msra.mxu0 %v2684
    %2935 = vmatpush.bf16.msra.mxu0 %v2681
    %2936 = vmatpush.bf16.msra.mxu0 %v2678
    %2937 = vmatmul.bf16.gmra.mxu0 %v2163
    %v2938 = vpop.f32.mrf.mxu0
    %v2939 = vadd.f32 %v2926, %v2938
    %v2940 = vpop.f32.mrf.mxu0
    %2941 = vdwg.mxu0
    %2942 = vmatpush.bf16.msra.mxu0 %v2723
    %2943 = vmatpush.bf16.msra.mxu0 %v2720
    %2944 = vmatpush.bf16.msra.mxu0 %v2717
    %2945 = vmatpush.bf16.msra.mxu0 %v2714
    %2946 = vmatpush.bf16.msra.mxu0 %v2711
    %2947 = vmatpush.bf16.msra.mxu0 %v2708
    %2948 = vmatpush.bf16.msra.mxu0 %v2705
    %2949 = vmatpush.bf16.msra.mxu0 %v2702
    %2950 = vmatmul.bf16.gmra.mxu0 %v2164
    %v2951 = vpop.f32.mrf.mxu0
    %v2952 = vadd.f32 %v2939, %v2951
    %v2953 = vpop.f32.mrf.mxu0
    %2954 = vdwg.mxu0
    %2955 = vmatpush.bf16.msra.mxu0 0
    %2956 = vmatpush.bf16.msra.mxu0 0
    %2957 = vmatpush.bf16.msra.mxu0 0
    %2958 = vmatpush.bf16.msra.mxu0 0
    %2959 = vmatpush.bf16.msra.mxu0 0
    %2960 = vmatpush.bf16.msra.mxu0 0
    %2961 = vmatpush.bf16.msra.mxu0 0
    %2962 = vmatpush.bf16.msra.mxu0 %v2833
    %2963 = vmatmul.bf16.gmra.mxu0 %v2826
    %v2964 = vpop.f32.mrf.mxu0
    %v2965 = vadd.f32 %v2952, %v2964
    %v2966 = vpop.f32.mrf.mxu0
    %2967 = vdwg.mxu0
    %2968 = vmatpush.bf16.msra.mxu0 %v2652
    %2969 = vmatpush.bf16.msra.mxu0 %v2649
    %2970 = vmatpush.bf16.msra.mxu0 %v2646
    %2971 = vmatpush.bf16.msra.mxu0 %v2643
    %2972 = vmatpush.bf16.msra.mxu0 %v2640
    %2973 = vmatpush.bf16.msra.mxu0 %v2637
    %2974 = vmatpush.bf16.msra.mxu0 %v2634
    %2975 = vmatpush.bf16.msra.mxu0 %v2631
    %2976 = vmatmul.bf16.gmra.mxu0 %v2161
    %v2977 = vpop.f32.mrf.mxu0
    %v2978 = vadd.f32 %v2300, %v2977
    %v2979 = vpop.f32.mrf.mxu0
    %2980 = vdwg.mxu0
    %2981 = vmatpush.bf16.msra.mxu0 %v2676
    %2982 = vmatpush.bf16.msra.mxu0 %v2673
    %2983 = vmatpush.bf16.msra.mxu0 %v2670
    %2984 = vmatpush.bf16.msra.mxu0 %v2667
    %2985 = vmatpush.bf16.msra.mxu0 %v2664
    %2986 = vmatpush.bf16.msra.mxu0 %v2661
    %2987 = vmatpush.bf16.msra.mxu0 %v2658
    %2988 = vmatpush.bf16.msra.mxu0 %v2655
    %2989 = vmatmul.bf16.gmra.mxu0 %v2162
    %v2990 = vpop.f32.mrf.mxu0
    %v2991 = vadd.f32 %v2978, %v2990
    %v2992 = vpop.f32.mrf.mxu0
    %2993 = vdwg.mxu0
    %2994 = vmatpush.bf16.msra.mxu0 %v2700
    %2995 = vmatpush.bf16.msra.mxu0 %v2697
    %2996 = vmatpush.bf16.msra.mxu0 %v2694
    %2997 = vmatpush.bf16.msra.mxu0 %v2691
    %2998 = vmatpush.bf16.msra.mxu0 %v2688
    %2999 = vmatpush.bf16.msra.mxu0 %v2685
    %3000 = vmatpush.bf16.msra.mxu0 %v2682
    %3001 = vmatpush.bf16.msra.mxu0 %v2679
    %3002 = vmatmul.bf16.gmra.mxu0 %v2163
    %v3003 = vpop.f32.mrf.mxu0
    %v3004 = vadd.f32 %v2991, %v3003
    %v3005 = vpop.f32.mrf.mxu0
    %3006 = vdwg.mxu0
    %3007 = vmatpush.bf16.msra.mxu0 %v2724
    %3008 = vmatpush.bf16.msra.mxu0 %v2721
    %3009 = vmatpush.bf16.msra.mxu0 %v2718
    %3010 = vmatpush.bf16.msra.mxu0 %v2715
    %3011 = vmatpush.bf16.msra.mxu0 %v2712
    %3012 = vmatpush.bf16.msra.mxu0 %v2709
    %3013 = vmatpush.bf16.msra.mxu0 %v2706
    %3014 = vmatpush.bf16.msra.mxu0 %v2703
    %3015 = vmatmul.bf16.gmra.mxu0 %v2164
    %v3016 = vpop.f32.mrf.mxu0
    %v3017 = vadd.f32 %v3004, %v3016
    %v3018 = vpop.f32.mrf.mxu0
    %3019 = vdwg.mxu0
    %3020 = vmatpush.bf16.msra.mxu0 0
    %3021 = vmatpush.bf16.msra.mxu0 0
    %3022 = vmatpush.bf16.msra.mxu0 0
    %3023 = vmatpush.bf16.msra.mxu0 0
    %3024 = vmatpush.bf16.msra.mxu0 0
    %3025 = vmatpush.bf16.msra.mxu0 0
    %3026 = vmatpush.bf16.msra.mxu0 0
    %3027 = vmatpush.bf16.msra.mxu0 %v2836
    %3028 = vmatmul.bf16.gmra.mxu0 %v2826
    %v3029 = vpop.f32.mrf.mxu0
    %v3030 = vadd.f32 %v3017, %v3029
    %v3031 = vpop.f32.mrf.mxu0
    %3032 = vdwg.mxu0
    %v3033 = vmax.f32 %v2900, 0.0
    %v3034 = vmax.f32 %v2965, 0.0
    %v3035 = vmax.f32 %v3030, 0.0
    %v3036 = vpack.c.bf16 %v3033, %v3033
    %v3037 = vpack.c.bf16 %v3034, %v3034
    %v3038 = vpack.c.bf16 %v3035, %v3035
    %v3039 = vld [vmem:[#allocation5] sm:$0xff]
    %v3040 = vld [vmem:[#allocation5 + $0x8] sm:$0xff]
    %v3041 = vld [vmem:[#allocation5 + $0x10] sm:$0xff]
    %v3042 = vld [vmem:[#allocation5 + $0x18] sm:$0xff]
    %v3043 = vld [vmem:[#allocation5 + $0x20] sm:$0xff]
    %v3044 = vld [vmem:[#allocation5 + $0x28] sm:$0xff]
    %v3045 = vld [vmem:[#allocation5 + $0x30] sm:$0xff]
    %v3046 = vld [vmem:[#allocation5 + $0x38] sm:$0xff]
    %v3047 = vld [vmem:[#allocation5 + $0x40] sm:$0xff]
    %v3048 = vld [vmem:[#allocation5 + $0x48] sm:$0xff]
    %v3049 = vld [vmem:[#allocation5 + $0x50] sm:$0xff]
    %v3050 = vld [vmem:[#allocation5 + $0x58] sm:$0xff]
    %v3051 = vld [vmem:[#allocation5 + $0x60] sm:$0xff]
    %v3052 = vld [vmem:[#allocation5 + $0x68] sm:$0xff]
    %v3053 = vld [vmem:[#allocation5 + $0x70] sm:$0xff]
    %v3054 = vld [vmem:[#allocation5 + $0x78] sm:$0xff]
    %v3055 = vld [vmem:[#allocation5 + $0x80] sm:$0xff]
    %v3056 = vld [vmem:[#allocation5 + $0x88] sm:$0xff]
    %v3057 = vld [vmem:[#allocation5 + $0x90] sm:$0xff]
    %v3058 = vld [vmem:[#allocation5 + $0x98] sm:$0xff]
    %v3059 = vld [vmem:[#allocation5 + $0xa0] sm:$0xff]
    %v3060 = vld [vmem:[#allocation5 + $0xa8] sm:$0xff]
    %v3061 = vld [vmem:[#allocation5 + $0xb0] sm:$0xff]
    %v3062 = vld [vmem:[#allocation5 + $0xb8] sm:$0xff]
    %v3063 = vld [vmem:[#allocation5 + $0xc0] sm:$0xff]
    %v3064 = vld [vmem:[#allocation5 + $0xc8] sm:$0xff]
    %v3065 = vld [vmem:[#allocation5 + $0xd0] sm:$0xff]
    %v3066 = vld [vmem:[#allocation5 + $0xd8] sm:$0xff]
    %v3067 = vld [vmem:[#allocation5 + $0xe0] sm:$0xff]
    %v3068 = vld [vmem:[#allocation5 + $0xe8] sm:$0xff]
    %v3069 = vld [vmem:[#allocation5 + $0xf0] sm:$0xff]
    %v3070 = vld [vmem:[#allocation5 + $0xf8] sm:$0xff]
    %v3071 = vld [vmem:[#allocation5 + $0x100] sm:$0xff]
    %v3072 = vld [vmem:[#allocation5 + $0x108] sm:$0xff]
    %v3073 = vld [vmem:[#allocation5 + $0x110] sm:$0xff]
    %v3074 = vld [vmem:[#allocation5 + $0x118] sm:$0xff]
    %v3075 = vld [vmem:[#allocation5 + $0x120] sm:$0xff]
    %v3076 = vld [vmem:[#allocation5 + $0x128] sm:$0xff]
    %v3077 = vld [vmem:[#allocation5 + $0x130] sm:$0xff]
    %v3078 = vld [vmem:[#allocation5 + $0x138] sm:$0xff]
    %v3079 = vld [vmem:[%s8] sm:$0x3]
    %v3081 = vperm.slane %v3079, 0
    %v3082 = vperm.slane %v3079, 1
    %v3125 = vunpack.c.l.b16 %v3039
    %v3126 = vunpack.c.h.b16 %v3039
    %v3127 = vunpack.c.l.b16 %v3040
    %v3128 = vunpack.c.h.b16 %v3040
    %v3129 = vunpack.c.l.b16 %v3041
    %v3130 = vunpack.c.h.b16 %v3041
    %v3131 = vunpack.c.l.b16 %v3042
    %v3132 = vunpack.c.h.b16 %v3042
    %v3133 = vunpack.c.l.b16 %v3043
    %v3134 = vunpack.c.h.b16 %v3043
    %v3135 = vunpack.c.l.b16 %v3044
    %v3136 = vunpack.c.h.b16 %v3044
    %v3137 = vunpack.c.l.b16 %v3045
    %v3138 = vunpack.c.h.b16 %v3045
    %v3139 = vunpack.c.l.b16 %v3046
    %v3140 = vunpack.c.h.b16 %v3046
    %v3141 = vunpack.c.l.b16 %v3047
    %v3142 = vunpack.c.h.b16 %v3047
    %v3143 = vunpack.c.l.b16 %v3048
    %v3144 = vunpack.c.h.b16 %v3048
    %v3145 = vunpack.c.l.b16 %v3049
    %v3146 = vunpack.c.h.b16 %v3049
    %v3147 = vunpack.c.l.b16 %v3050
    %v3148 = vunpack.c.h.b16 %v3050
    %v3149 = vunpack.c.l.b16 %v3051
    %v3150 = vunpack.c.h.b16 %v3051
    %v3151 = vunpack.c.l.b16 %v3052
    %v3152 = vunpack.c.h.b16 %v3052
    %v3153 = vunpack.c.l.b16 %v3053
    %v3154 = vunpack.c.h.b16 %v3053
    %v3155 = vunpack.c.l.b16 %v3054
    %v3156 = vunpack.c.h.b16 %v3054
    %v3157 = vunpack.c.l.b16 %v3055
    %v3158 = vunpack.c.h.b16 %v3055
    %v3159 = vunpack.c.l.b16 %v3056
    %v3160 = vunpack.c.h.b16 %v3056
    %v3161 = vunpack.c.l.b16 %v3057
    %v3162 = vunpack.c.h.b16 %v3057
    %v3163 = vunpack.c.l.b16 %v3058
    %v3164 = vunpack.c.h.b16 %v3058
    %v3165 = vunpack.c.l.b16 %v3059
    %v3166 = vunpack.c.h.b16 %v3059
    %v3167 = vunpack.c.l.b16 %v3060
    %v3168 = vunpack.c.h.b16 %v3060
    %v3169 = vunpack.c.l.b16 %v3061
    %v3170 = vunpack.c.h.b16 %v3061
    %v3171 = vunpack.c.l.b16 %v3062
    %v3172 = vunpack.c.h.b16 %v3062
    %v3173 = vunpack.c.l.b16 %v3063
    %v3174 = vunpack.c.h.b16 %v3063
    %v3175 = vunpack.c.l.b16 %v3064
    %v3176 = vunpack.c.h.b16 %v3064
    %v3177 = vunpack.c.l.b16 %v3065
    %v3178 = vunpack.c.h.b16 %v3065
    %v3179 = vunpack.c.l.b16 %v3066
    %v3180 = vunpack.c.h.b16 %v3066
    %v3181 = vunpack.c.l.b16 %v3067
    %v3182 = vunpack.c.h.b16 %v3067
    %v3183 = vunpack.c.l.b16 %v3068
    %v3184 = vunpack.c.h.b16 %v3068
    %v3185 = vunpack.c.l.b16 %v3069
    %v3186 = vunpack.c.h.b16 %v3069
    %v3187 = vunpack.c.l.b16 %v3070
    %v3188 = vunpack.c.h.b16 %v3070
    %v3189 = vunpack.c.l.b16 %v3071
    %v3190 = vunpack.c.h.b16 %v3071
    %v3191 = vunpack.c.l.b16 %v3072
    %v3192 = vunpack.c.h.b16 %v3072
    %v3193 = vunpack.c.l.b16 %v3073
    %v3194 = vunpack.c.h.b16 %v3073
    %v3195 = vunpack.c.l.b16 %v3074
    %v3196 = vunpack.c.h.b16 %v3074
    %v3197 = vunpack.c.l.b16 %v3075
    %v3198 = vunpack.c.h.b16 %v3075
    %v3199 = vunpack.c.l.b16 %v3076
    %v3200 = vunpack.c.h.b16 %v3076
    %v3201 = vunpack.c.l.b16 %v3077
    %v3202 = vunpack.c.h.b16 %v3077
    %v3203 = vunpack.c.l.b16 %v3078
    %v3204 = vunpack.c.h.b16 %v3078
    %v3205 = vpack.c.b16 %v3127, %v3125
    %v3206 = vpack.c.b16 %v3128, %v3126
    %v3207 = vpack.c.b16 %v3131, %v3129
    %v3208 = vpack.c.b16 %v3132, %v3130
    %v3209 = vpack.c.b16 %v3135, %v3133
    %v3210 = vpack.c.b16 %v3136, %v3134
    %v3211 = vpack.c.b16 %v3139, %v3137
    %v3212 = vpack.c.b16 %v3140, %v3138
    %v3213 = vpack.c.b16 %v3143, %v3141
    %v3214 = vpack.c.b16 %v3144, %v3142
    %v3215 = vpack.c.b16 %v3147, %v3145
    %v3216 = vpack.c.b16 %v3148, %v3146
    %v3217 = vpack.c.b16 %v3151, %v3149
    %v3218 = vpack.c.b16 %v3152, %v3150
    %v3219 = vpack.c.b16 %v3155, %v3153
    %v3220 = vpack.c.b16 %v3156, %v3154
    %v3221 = vpack.c.b16 %v3159, %v3157
    %v3222 = vpack.c.b16 %v3160, %v3158
    %v3223 = vpack.c.b16 %v3163, %v3161
    %v3224 = vpack.c.b16 %v3164, %v3162
    %v3225 = vpack.c.b16 %v3167, %v3165
    %v3226 = vpack.c.b16 %v3168, %v3166
    %v3227 = vpack.c.b16 %v3171, %v3169
    %v3228 = vpack.c.b16 %v3172, %v3170
    %v3229 = vpack.c.b16 %v3175, %v3173
    %v3230 = vpack.c.b16 %v3176, %v3174
    %v3231 = vpack.c.b16 %v3179, %v3177
    %v3232 = vpack.c.b16 %v3180, %v3178
    %v3233 = vpack.c.b16 %v3183, %v3181
    %v3234 = vpack.c.b16 %v3184, %v3182
    %v3235 = vpack.c.b16 %v3187, %v3185
    %v3236 = vpack.c.b16 %v3188, %v3186
    %v3237 = vpack.c.b16 %v3191, %v3189
    %v3238 = vpack.c.b16 %v3192, %v3190
    %v3239 = vpack.c.b16 %v3195, %v3193
    %v3240 = vpack.c.b16 %v3196, %v3194
    %v3241 = vpack.c.b16 %v3199, %v3197
    %v3242 = vpack.c.b16 %v3200, %v3198
    %v3243 = vpack.c.b16 %v3203, %v3201
    %v3244 = vpack.c.b16 %v3204, %v3202
    %vm3285 = vcmask 523264
    %v3287 = vsel %vm3285, %v3038, 0
    %3289 = vmatpush.bf16.msra.mxu0 %v3219
    %3290 = vmatpush.bf16.msra.mxu0 %v3217
    %3291 = vmatpush.bf16.msra.mxu0 %v3215
    %3292 = vmatpush.bf16.msra.mxu0 %v3213
    %3293 = vmatpush.bf16.msra.mxu0 %v3211
    %3294 = vmatpush.bf16.msra.mxu0 %v3209
    %3295 = vmatpush.bf16.msra.mxu0 %v3207
    %3296 = vmatpush.bf16.msra.mxu0 %v3205
    %3297 = vmatmul.bf16.gmra.mxu0 %v3036
    %v3298 = vpop.f32.mrf.mxu0
    %v3299 = vadd.f32 %v3081, %v3298
    %v3300 = vpop.f32.mrf.mxu0
    %3301 = vdwg.mxu0
    %3302 = vmatpush.bf16.msra.mxu0 %v3235
    %3303 = vmatpush.bf16.msra.mxu0 %v3233
    %3304 = vmatpush.bf16.msra.mxu0 %v3231
    %3305 = vmatpush.bf16.msra.mxu0 %v3229
    %3306 = vmatpush.bf16.msra.mxu0 %v3227
    %3307 = vmatpush.bf16.msra.mxu0 %v3225
    %3308 = vmatpush.bf16.msra.mxu0 %v3223
    %3309 = vmatpush.bf16.msra.mxu0 %v3221
    %3310 = vmatmul.bf16.gmra.mxu0 %v3037
    %v3311 = vpop.f32.mrf.mxu0
    %v3312 = vadd.f32 %v3299, %v3311
    %v3313 = vpop.f32.mrf.mxu0
    %3314 = vdwg.mxu0
    %3315 = vmatpush.bf16.msra.mxu0 0
    %3316 = vmatpush.bf16.msra.mxu0 0
    %3317 = vmatpush.bf16.msra.mxu0 0
    %3318 = vmatpush.bf16.msra.mxu0 0
    %3319 = vmatpush.bf16.msra.mxu0 %v3243
    %3320 = vmatpush.bf16.msra.mxu0 %v3241
    %3321 = vmatpush.bf16.msra.mxu0 %v3239
    %3322 = vmatpush.bf16.msra.mxu0 %v3237
    %3323 = vmatmul.bf16.gmra.mxu0 %v3287
    %v3324 = vpop.f32.mrf.mxu0
    %v3325 = vadd.f32 %v3312, %v3324
    %v3326 = vpop.f32.mrf.mxu0
    %3327 = vdwg.mxu0
    %3328 = vmatpush.bf16.msra.mxu0 %v3220
    %3329 = vmatpush.bf16.msra.mxu0 %v3218
    %3330 = vmatpush.bf16.msra.mxu0 %v3216
    %3331 = vmatpush.bf16.msra.mxu0 %v3214
    %3332 = vmatpush.bf16.msra.mxu0 %v3212
    %3333 = vmatpush.bf16.msra.mxu0 %v3210
    %3334 = vmatpush.bf16.msra.mxu0 %v3208
    %3335 = vmatpush.bf16.msra.mxu0 %v3206
    %3336 = vmatmul.bf16.gmra.mxu0 %v3036
    %v3337 = vpop.f32.mrf.mxu0
    %v3338 = vadd.f32 %v3082, %v3337
    %v3339 = vpop.f32.mrf.mxu0
    %3340 = vdwg.mxu0
    %3341 = vmatpush.bf16.msra.mxu0 %v3236
    %3342 = vmatpush.bf16.msra.mxu0 %v3234
    %3343 = vmatpush.bf16.msra.mxu0 %v3232
    %3344 = vmatpush.bf16.msra.mxu0 %v3230
    %3345 = vmatpush.bf16.msra.mxu0 %v3228
    %3346 = vmatpush.bf16.msra.mxu0 %v3226
    %3347 = vmatpush.bf16.msra.mxu0 %v3224
    %3348 = vmatpush.bf16.msra.mxu0 %v3222
    %3349 = vmatmul.bf16.gmra.mxu0 %v3037
    %v3350 = vpop.f32.mrf.mxu0
    %v3351 = vadd.f32 %v3338, %v3350
    %v3352 = vpop.f32.mrf.mxu0
    %3353 = vdwg.mxu0
    %3354 = vmatpush.bf16.msra.mxu0 0
    %3355 = vmatpush.bf16.msra.mxu0 0
    %3356 = vmatpush.bf16.msra.mxu0 0
    %3357 = vmatpush.bf16.msra.mxu0 0
    %3358 = vmatpush.bf16.msra.mxu0 %v3244
    %3359 = vmatpush.bf16.msra.mxu0 %v3242
    %3360 = vmatpush.bf16.msra.mxu0 %v3240
    %3361 = vmatpush.bf16.msra.mxu0 %v3238
    %3362 = vmatmul.bf16.gmra.mxu0 %v3287
    %v3363 = vpop.f32.mrf.mxu0
    %v3364 = vadd.f32 %v3351, %v3363
    %v3365 = vpop.f32.mrf.mxu0
    %3366 = vdwg.mxu0
    %v3367 = vmax.f32 %v3325, 0.0
    %v3368 = vmax.f32 %v3364, 0.0
    %v3369 = vpack.c.bf16 %v3367, %v3367
    %v3370 = vpack.c.bf16 %v3368, %v3368
    %v3371 = vld [vmem:[#allocation7] sm:$0xf]
    %v3372 = vld [vmem:[#allocation7 + $0x4] sm:$0xf]
    %v3373 = vld [vmem:[#allocation7 + $0x8] sm:$0xf]
    %v3374 = vld [vmem:[#allocation7 + $0xc] sm:$0xf]
    %v3375 = vld [vmem:[#allocation7 + $0x10] sm:$0xf]
    %v3376 = vld [vmem:[#allocation7 + $0x14] sm:$0xf]
    %v3377 = vld [vmem:[#allocation7 + $0x18] sm:$0xf]
    %v3378 = vld [vmem:[#allocation7 + $0x1c] sm:$0xf]
    %v3379 = vld [vmem:[#allocation7 + $0x20] sm:$0xf]
    %v3380 = vld [vmem:[#allocation7 + $0x24] sm:$0xf]
    %v3381 = vld [vmem:[#allocation7 + $0x28] sm:$0xf]
    %v3382 = vld [vmem:[#allocation7 + $0x2c] sm:$0xf]
    %v3383 = vld [vmem:[#allocation7 + $0x30] sm:$0xf]
    %v3384 = vld [vmem:[#allocation7 + $0x34] sm:$0xf]
    %v3385 = vld [vmem:[#allocation7 + $0x38] sm:$0xf]
    %v3386 = vld [vmem:[#allocation7 + $0x3c] sm:$0xf]
    %v3387 = vld [vmem:[#allocation7 + $0x40] sm:$0xf]
    %v3388 = vld [vmem:[#allocation7 + $0x44] sm:$0xf]
    %v3389 = vld [vmem:[#allocation7 + $0x48] sm:$0xf]
    %v3390 = vld [vmem:[#allocation7 + $0x4c] sm:$0xf]
    %v3391 = vld [vmem:[#allocation7 + $0x50] sm:$0xf]
    %v3392 = vld [vmem:[#allocation7 + $0x54] sm:$0xf]
    %v3393 = vld [vmem:[#allocation7 + $0x58] sm:$0xf]
    %v3394 = vld [vmem:[#allocation7 + $0x5c] sm:$0xf]
    %v3395 = vld [vmem:[#allocation7 + $0x60] sm:$0xf]
    %v3396 = vld [vmem:[#allocation7 + $0x64] sm:$0xf]
    %v3397 = vld [vmem:[#allocation7 + $0x68] sm:$0xf]
    %v3398 = vld [vmem:[#allocation7 + $0x6c] sm:$0xf]
    %v3399 = vld [vmem:[#allocation7 + $0x70] sm:$0xf]
    %v3400 = vld [vmem:[#allocation7 + $0x74] sm:$0xf]
    %v3401 = vld [vmem:[#allocation7 + $0x78] sm:$0xf]
    %v3402 = vld [vmem:[#allocation7 + $0x7c] sm:$0xf]
    %v3403 = vld [vmem:[%s9] sm:$0x1]
    %v3405 = vperm.slane %v3403, 0
    %v3439 = vunpack.c.l.b16 %v3371
    %v3440 = vunpack.c.l.b16 %v3372
    %v3441 = vunpack.c.l.b16 %v3373
    %v3442 = vunpack.c.l.b16 %v3374
    %v3443 = vunpack.c.l.b16 %v3375
    %v3444 = vunpack.c.l.b16 %v3376
    %v3445 = vunpack.c.l.b16 %v3377
    %v3446 = vunpack.c.l.b16 %v3378
    %v3447 = vunpack.c.l.b16 %v3379
    %v3448 = vunpack.c.l.b16 %v3380
    %v3449 = vunpack.c.l.b16 %v3381
    %v3450 = vunpack.c.l.b16 %v3382
    %v3451 = vunpack.c.l.b16 %v3383
    %v3452 = vunpack.c.l.b16 %v3384
    %v3453 = vunpack.c.l.b16 %v3385
    %v3454 = vunpack.c.l.b16 %v3386
    %v3455 = vunpack.c.l.b16 %v3387
    %v3456 = vunpack.c.l.b16 %v3388
    %v3457 = vunpack.c.l.b16 %v3389
    %v3458 = vunpack.c.l.b16 %v3390
    %v3459 = vunpack.c.l.b16 %v3391
    %v3460 = vunpack.c.l.b16 %v3392
    %v3461 = vunpack.c.l.b16 %v3393
    %v3462 = vunpack.c.l.b16 %v3394
    %v3463 = vunpack.c.l.b16 %v3395
    %v3464 = vunpack.c.l.b16 %v3396
    %v3465 = vunpack.c.l.b16 %v3397
    %v3466 = vunpack.c.l.b16 %v3398
    %v3467 = vunpack.c.l.b16 %v3399
    %v3468 = vunpack.c.l.b16 %v3400
    %v3469 = vunpack.c.l.b16 %v3401
    %v3470 = vunpack.c.l.b16 %v3402
    %v3471 = vpack.c.b16 %v3440, %v3439
    %v3472 = vpack.c.b16 %v3442, %v3441
    %v3473 = vpack.c.b16 %v3444, %v3443
    %v3474 = vpack.c.b16 %v3446, %v3445
    %v3475 = vpack.c.b16 %v3448, %v3447
    %v3476 = vpack.c.b16 %v3450, %v3449
    %v3477 = vpack.c.b16 %v3452, %v3451
    %v3478 = vpack.c.b16 %v3454, %v3453
    %v3479 = vpack.c.b16 %v3456, %v3455
    %v3480 = vpack.c.b16 %v3458, %v3457
    %v3481 = vpack.c.b16 %v3460, %v3459
    %v3482 = vpack.c.b16 %v3462, %v3461
    %v3483 = vpack.c.b16 %v3464, %v3463
    %v3484 = vpack.c.b16 %v3466, %v3465
    %v3485 = vpack.c.b16 %v3468, %v3467
    %v3486 = vpack.c.b16 %v3470, %v3469
    %3503 = vmatpush.bf16.msra.mxu0 %v3478
    %3504 = vmatpush.bf16.msra.mxu0 %v3477
    %3505 = vmatpush.bf16.msra.mxu0 %v3476
    %3506 = vmatpush.bf16.msra.mxu0 %v3475
    %3507 = vmatpush.bf16.msra.mxu0 %v3474
    %3508 = vmatpush.bf16.msra.mxu0 %v3473
    %3509 = vmatpush.bf16.msra.mxu0 %v3472
    %3510 = vmatpush.bf16.msra.mxu0 %v3471
    %3511 = vmatmul.bf16.gmra.mxu0 %v3369
    %v3512 = vpop.f32.mrf.mxu0
    %v3513 = vadd.f32 %v3405, %v3512
    %v3514 = vpop.f32.mrf.mxu0
    %3515 = vdwg.mxu0
    %3516 = vmatpush.bf16.msra.mxu0 %v3486
    %3517 = vmatpush.bf16.msra.mxu0 %v3485
    %3518 = vmatpush.bf16.msra.mxu0 %v3484
    %3519 = vmatpush.bf16.msra.mxu0 %v3483
    %3520 = vmatpush.bf16.msra.mxu0 %v3482
    %3521 = vmatpush.bf16.msra.mxu0 %v3481
    %3522 = vmatpush.bf16.msra.mxu0 %v3480
    %3523 = vmatpush.bf16.msra.mxu0 %v3479
    %3524 = vmatmul.bf16.gmra.mxu0 %v3370
    %v3525 = vpop.f32.mrf.mxu0
    %v3526 = vadd.f32 %v3513, %v3525
    %v3527 = vpop.f32.mrf.mxu0
    %3528 = vdwg.mxu0
    %v3529 = vmax.f32 %v3526, 0.0
    %v3530 = vpack.c.bf16 %v3529, %v3529
    %v3531 = vld [vmem:[#allocation8] sm:$0xf]
    %v3532 = vld [vmem:[#allocation8 + $0x4] sm:$0xf]
    %v3533 = vld [vmem:[#allocation8 + $0x8] sm:$0xf]
    %v3534 = vld [vmem:[#allocation8 + $0xc] sm:$0xf]
    %v3535 = vld [vmem:[#allocation8 + $0x10] sm:$0xf]
    %v3536 = vld [vmem:[#allocation8 + $0x14] sm:$0xf]
    %v3537 = vld [vmem:[#allocation8 + $0x18] sm:$0xf]
    %v3538 = vld [vmem:[#allocation8 + $0x1c] sm:$0xf]
    %v3539 = vld [vmem:[#allocation8 + $0x20] sm:$0xf]
    %v3540 = vld [vmem:[#allocation8 + $0x24] sm:$0xf]
    %v3541 = vld [vmem:[#allocation8 + $0x28] sm:$0xf]
    %v3542 = vld [vmem:[#allocation8 + $0x2c] sm:$0xf]
    %v3543 = vld [vmem:[#allocation8 + $0x30] sm:$0xf]
    %v3544 = vld [vmem:[#allocation8 + $0x34] sm:$0xf]
    %v3545 = vld [vmem:[#allocation8 + $0x38] sm:$0xf]
    %v3546 = vld [vmem:[#allocation8 + $0x3c] sm:$0xf]
    %v3547 = vld [vmem:[%s10] sm:$0x1]
    %v3549 = vperm.slane %v3547, 0
    %v3567 = vunpack.c.l.b16 %v3531
    %v3568 = vunpack.c.l.b16 %v3532
    %v3569 = vunpack.c.l.b16 %v3533
    %v3570 = vunpack.c.l.b16 %v3534
    %v3571 = vunpack.c.l.b16 %v3535
    %v3572 = vunpack.c.l.b16 %v3536
    %v3573 = vunpack.c.l.b16 %v3537
    %v3574 = vunpack.c.l.b16 %v3538
    %v3575 = vunpack.c.l.b16 %v3539
    %v3576 = vunpack.c.l.b16 %v3540
    %v3577 = vunpack.c.l.b16 %v3541
    %v3578 = vunpack.c.l.b16 %v3542
    %v3579 = vunpack.c.l.b16 %v3543
    %v3580 = vunpack.c.l.b16 %v3544
    %v3581 = vunpack.c.l.b16 %v3545
    %v3582 = vunpack.c.l.b16 %v3546
    %v3583 = vpack.c.b16 %v3568, %v3567
    %v3584 = vpack.c.b16 %v3570, %v3569
    %v3585 = vpack.c.b16 %v3572, %v3571
    %v3586 = vpack.c.b16 %v3574, %v3573
    %v3587 = vpack.c.b16 %v3576, %v3575
    %v3588 = vpack.c.b16 %v3578, %v3577
    %v3589 = vpack.c.b16 %v3580, %v3579
    %v3590 = vpack.c.b16 %v3582, %v3581
    %3599 = vmatpush.bf16.msra.mxu0 %v3590
    %3600 = vmatpush.bf16.msra.mxu0 %v3589
    %3601 = vmatpush.bf16.msra.mxu0 %v3588
    %3602 = vmatpush.bf16.msra.mxu0 %v3587
    %3603 = vmatpush.bf16.msra.mxu0 %v3586
    %3604 = vmatpush.bf16.msra.mxu0 %v3585
    %3605 = vmatpush.bf16.msra.mxu0 %v3584
    %3606 = vmatpush.bf16.msra.mxu0 %v3583
    %3607 = vmatmul.bf16.gmra.mxu0 %v3530
    %v3608 = vpop.f32.mrf.mxu0
    %v3609 = vadd.f32 %v3549, %v3608
    %v3610 = vpop.f32.mrf.mxu0
    %3611 = vdwg.mxu0
    %3612 = vst [vmem:[#allocation10] sm:$0xff] %v3609
    // Predicated region
    $region62: #{_lambda_.1} parent=1 // pred_check
      _
    $region63: #{_lambda_.1} parent=1 // pred_check_branch
      %3614 = sbr.rel (0) target = $region65
    $region64: #{_lambda_.1} parent=1 // pred_region
      %3616 = vsyncadd [#allocation4], 0
      %s3618 = sshll.u32 [#allocation10], 4
      %s3619 = int_to_ptr.vmem [resolvable:$true] %s3618
      %s3620 = sshll.u32 %s11, 4
      %s3621 = int_to_ptr.hbm [resolvable:$true] %s3620
      %3623 = dma.vmem_to_hbm [thread:$0]  %s3619, 128, %s3621, [#allocation4]
    $region65: #{_lambda_.1} parent=1 // pred_fallthru
      _
    // Predicated region
    $region66: #{_lambda_.1} parent=1 // pred_check
      _
    $region67: #{_lambda_.1} parent=1 // pred_check_branch
      %3625 = sbr.rel (0) target = $region69
    $region68: #{_lambda_.1} parent=1 // pred_region
      %3627 = dma.done [#allocation4], 128
    $region69: #{_lambda_.1} parent=1 // pred_fallthru
      _
    %3628 = vsyncpa [#allocation3], 1
    %3629 = vsyncpa [#allocation6], 1
    %3630 = vsyncpa [#allocation9], 1
    %3631 = vsyncpa [#allocation4], 1

</llo_original>
